<compile_context>
chip_gen: v6e
topology: v6e:2x2x1
jax: 0.10.0
libtpu: 0.0.40
codegen_flags: <defaults>
</compile_context>

<pallas_src>
import functools

import jax
import jax.numpy as jnp
from jax import lax
from jax.experimental import pallas as pl
from jax.experimental.pallas import tpu as pltpu


def _round_up(x, m):
    return ((x + m - 1) // m) * m


def conv_transpose3d_same(x, weight, bias, kernel_size, block_depth=8):
    """Forward of ConvTranspose3dSame:
       ReplicationPad3d((ka,kb)*3) -> ConvTranspose3d(stride=1, bias=True).

    x:      (N, Cin, D, H, W)     float32
    weight: (Cin, Cout, K, K, K)  float32 (PyTorch ConvTranspose3d layout)
    bias:   (Cout,)               float32
    returns (N, Cout, D+ka+kb+K-1, H+ka+kb+K-1, W+ka+kb+K-1) float32
    """
    k = int(kernel_size)
    ka = k // 2
    kb = ka - 1 if k % 2 == 0 else ka

    n, cin, d, h, w = x.shape
    cout = weight.shape[1]

    d1, h1, w1 = d + ka + kb, h + ka + kb, w + ka + kb            # replication-padded
    do, ho, wo = d1 + k - 1, h1 + k - 1, w1 + k - 1               # transposed-conv out
    dz, hz, wz = d1 + 2 * (k - 1), h1 + 2 * (k - 1), w1 + 2 * (k - 1)  # zero-padded in

    cin_p = _round_up(cin, 16)                 # bf16 packs 2 rows per sublane
    cout_p = _round_up(cout, 8)
    k2c = k * k * cin_p                        # contraction depth per depth tap
    lout = _round_up(ho * wz, 128)             # lane-padded output plane
    lin = _round_up((k - 1) * wz + (k - 1) + lout, 128)   # input plane + tap halo

    # Depth blocking: TD output planes per grid cell (auto-shrunk to keep the
    # f32 output block + accumulator modest on 64 MiB-VMEM parts).
    td = max(1, min(int(block_depth), do))
    while td > 1 and cout_p * td * lout * 4 > 8 * 1024 * 1024:
        td = -(-td // 2)
    dt = -(-do // td)                          # number of depth blocks
    dz_p = dt * td + k - 1                     # padded input depth (covers halo)
    inner = td + k - 1                         # input slices streamed per block

    # ---- XLA-side prep on the small/cheap tensors ---------------------------
    xb = x.astype(jnp.bfloat16)                                   # bf16 input stream
    xr = jnp.pad(xb, ((0, 0), (0, 0), (ka, kb), (ka, kb), (ka, kb)), mode="edge")
    xz = jnp.pad(xr, ((0, 0), (0, 0), (k - 1, k - 1), (k - 1, k - 1), (k - 1, k - 1)))
    # (N, Cin, Dz, Hz, Wz) -> (N, Dz, Cin, Hz*Wz); pad depth/channels/lanes.
    xz = jnp.transpose(xz, (0, 2, 1, 3, 4)).reshape(n, dz, cin, hz * wz)
    xz = jnp.pad(xz, ((0, 0), (0, dz_p - dz), (0, cin_p - cin), (0, lin - hz * wz)))

    # Weights: flip spatially; build (K, Cout_p, K*K*Cin_p) bf16 with the last
    # axis ordered (kh, kw, cin) to match the im2col scratch layout.
    wf = weight[:, :, ::-1, ::-1, ::-1]
    wt = jnp.transpose(wf, (2, 3, 4, 1, 0))                       # (k,k,k,cout,cin)
    wt = jnp.pad(wt, ((0, 0), (0, 0), (0, 0), (0, cout_p - cout), (0, cin_p - cin)))
    wk = jnp.transpose(wt, (0, 3, 1, 2, 4)).reshape(k, cout_p, k2c).astype(jnp.bfloat16)

    bk = jnp.pad(bias.astype(jnp.float32), (0, cout_p - cout)).reshape(cout_p, 1)

    # ---- Pallas kernel -------------------------------------------------------
    def kernel(x_ref, w_ref, b_ref, o_ref, col_ref, acc_ref):
        ss = pl.program_id(2)

        @pl.when(ss == 0)
        def _init():                           # seed accumulator with the bias
            bvec = jnp.broadcast_to(b_ref[...], (cout_p, lout))
            for j in range(td):
                acc_ref[j] = bvec

        # Expand this input depth slice once into the (k^2*cin_p, lout) im2col slab.
        for kh in range(k):
            for kw in range(k):
                start = kh * wz + kw                       # flat (kh,kw) lane offset
                row0 = (kh * k + kw) * cin_p
                col_ref[row0:row0 + cin_p, :] = x_ref[0, 0, :, start:start + lout]
        col = col_ref[...]

        # Input slice (depth tt*td + ss) is tap kd of output plane j = ss - kd:
        # one bf16 MXU dot of depth k^2*cin_p per valid tap.
        for kd in range(k):
            j = ss - kd

            @pl.when(jnp.logical_and(j >= 0, j < td))
            def _acc(kd=kd, j=j):
                acc_ref[j] = acc_ref[j] + jnp.dot(
                    w_ref[kd], col, preferred_element_type=jnp.float32)

        @pl.when(ss == inner - 1)
        def _flush():                          # lane-dense, statically indexed stores
            for j in range(td):
                o_ref[0, :, j * lout:(j + 1) * lout] = acc_ref[j]

    in_specs = [
        pl.BlockSpec((1, 1, cin_p, lin), lambda nn, tt, ss: (nn, tt * td + ss, 0, 0)),
        pl.BlockSpec((k, cout_p, k2c), lambda nn, tt, ss: (0, 0, 0)),
        pl.BlockSpec((cout_p, 1), lambda nn, tt, ss: (0, 0)),
    ]
    out_spec = pl.BlockSpec((1, cout_p, td * lout), lambda nn, tt, ss: (nn, 0, tt))

    vmem_need = (2 * cin_p * lin * 2            # double-buffered input slabs (bf16)
                 + 2 * cout_p * td * lout * 4   # double-buffered output block (f32)
                 + td * cout_p * lout * 4       # f32 plane accumulator
                 + k2c * lout * 2               # im2col scratch (bf16)
                 + 2 * (k * cout_p * k2c * 2 + cout_p * 4))
    vmem_limit = int(min(48 * 1024 * 1024, max(32 * 1024 * 1024, 2 * vmem_need)))

    out_raw = pl.pallas_call(
        kernel,
        out_shape=jax.ShapeDtypeStruct((n, cout_p, dt * td * lout), jnp.float32),
        grid=(n, dt, inner),
        in_specs=in_specs,
        out_specs=out_spec,
        scratch_shapes=[
            pltpu.VMEM((k2c, lout), jnp.bfloat16),        # im2col slab
            pltpu.VMEM((td, cout_p, lout), jnp.float32),  # per-plane accumulator
        ],
        compiler_params=pltpu.CompilerParams(
            dimension_semantics=("parallel", "parallel", "arbitrary"),
            vmem_limit_bytes=vmem_limit),
    )(xz, wk, bk)

    # (N, Cout_p, DT*TD*Lout) -> NCDHW via free reshapes + cheap crops.
    out = out_raw.reshape(n, cout_p, dt * td, lout)[:, :cout, :do, :ho * wz]
    out = out.reshape(n, cout, do, ho, wz)[..., :wo]
    return out
    # TODO(synk): for very large volumes also tile the output plane along lanes
    # (128-multiple chunks with a (k-1)*wz+(k-1) lane halo on the input block).


def _reference(x, weight, bias, kernel_size):
    k = int(kernel_size)
    ka = k // 2
    kb = ka - 1 if k % 2 == 0 else ka
    xr = jnp.pad(x, ((0, 0), (0, 0), (ka, kb), (ka, kb), (ka, kb)), mode="edge")
    out = lax.conv_transpose(
        xr, weight, strides=(1, 1, 1), padding="VALID",
        dimension_numbers=("NCDHW", "OIDHW", "NCDHW"),
        transpose_kernel=True, precision=lax.Precision.HIGHEST)
    return out + bias[None, :, None, None, None]


def _run_case(key, batch, cin, cout, spatial, ksize):
    k_x, k_w, k_b = jax.random.split(key, 3)
    x = jax.random.normal(k_x, (batch, cin, spatial, spatial, spatial), jnp.float32)

    # Deterministic synthetic params (PyTorch-style uniform scale).
    fan_in = cin * ksize ** 3
    bound = 1.0 / float(fan_in) ** 0.5
    weight = jax.random.uniform(
        k_w, (cin, cout, ksize, ksize, ksize), jnp.float32, -bound, bound)
    bias = jax.random.uniform(k_b, (cout,), jnp.float32, -bound, bound)

    fwd = jax.jit(functools.partial(conv_transpose3d_same, kernel_size=ksize))
    out = jax.block_until_ready(fwd(x, weight, bias))

    ref = _reference(x, weight, bias, ksize)
    assert out.shape == ref.shape, (out.shape, ref.shape)
    max_err = float(jnp.max(jnp.abs(out - ref)))
    # bf16-streamed input + bf16 weights, f32 accumulation.
    assert max_err < 2e-2, max_err
    return max_err


if __name__ == "__main__":
    key = jax.random.PRNGKey(0)
    k_odd, k_even = jax.random.split(key)
    _run_case(k_odd, batch=2, cin=4, cout=8, spatial=8, ksize=3)    # main (odd-k) path
    _run_case(k_even, batch=1, cin=3, cout=5, spatial=6, ksize=4)   # even-k (ka != kb)
    print("KERNEL_OK")
</pallas_src>

<mosaic_0001>
module attributes {stable_mosaic.version = 11 : i64} {
  func.func @kernel(%arg0: i32, %arg1: i32, %arg2: i32, %arg3: memref<1x1x16x384xbf16, #tpu.memory_space<vmem>>, %arg4: memref<3x8x144xbf16, #tpu.memory_space<vmem>>, %arg5: memref<8x1xf32, #tpu.memory_space<vmem>>, %arg6: memref<1x8x2048xf32, #tpu.memory_space<vmem>>, %arg7: memref<144x256xbf16, #tpu.memory_space<vmem>>, %arg8: memref<8x8x256xf32, #tpu.memory_space<vmem>>) attributes {dimension_semantics = [#tpu.dimension_semantics<parallel>, #tpu.dimension_semantics<parallel>, #tpu.dimension_semantics<arbitrary>], iteration_bounds = array<i64: 2, 2, 10>, scalar_prefetch = 0 : i64, scratch_operands = 2 : i64, tpu.core_type = #tpu.core_type<tc>, window_params = [{transform_indices = @transform_0, window_bounds = array<i64: 1, 1, 16, 384>}, {pipeline_mode = #tpu.pipeline_mode<synchronous>, transform_indices = @transform_1, window_bounds = array<i64: 3, 8, 144>}, {pipeline_mode = #tpu.pipeline_mode<synchronous>, transform_indices = @transform_2, window_bounds = array<i64: 8, 1>}, {transform_indices = @transform_3, window_bounds = array<i64: 1, 8, 2048>}]} {
    %c0_i32 = arith.constant 0 : i32
    %0 = arith.cmpi eq, %arg2, %c0_i32 : i32
    %1 = arith.extui %0 : i1 to i32
    %c0_i32_0 = arith.constant 0 : i32
    %2 = arith.cmpi ne, %1, %c0_i32_0 : i32
    scf.if %2 {
      %c0_51 = arith.constant 0 : index
      %c0_52 = arith.constant 0 : index
      %52 = vector.load %arg5[%c0_51, %c0_52] : memref<8x1xf32, #tpu.memory_space<vmem>>, vector<8x1xf32>
      %53 = vector.shape_cast %52 : vector<8x1xf32> to vector<8x1xf32>
      %54 = vector.broadcast %53 : vector<8x1xf32> to vector<8x256xf32>
      %c0_53 = arith.constant 0 : index
      %c0_54 = arith.constant 0 : index
      %c0_55 = arith.constant 0 : index
      %55 = vector.load %arg8[%c0_53, %c0_54, %c0_55] : memref<8x8x256xf32, #tpu.memory_space<vmem>>, vector<1x8x256xf32>
      %56 = vector.shape_cast %55 : vector<1x8x256xf32> to vector<8x256xf32>
      %57 = vector.shape_cast %54 : vector<8x256xf32> to vector<1x8x256xf32>
      tpu.vector_store %arg8[%c0_53, %c0_54, %c0_55], %57 {strides = array<i32>} : memref<8x8x256xf32, #tpu.memory_space<vmem>>, vector<1x8x256xf32>,
      %c1_56 = arith.constant 1 : index
      %c0_57 = arith.constant 0 : index
      %c0_58 = arith.constant 0 : index
      %58 = vector.load %arg8[%c1_56, %c0_57, %c0_58] : memref<8x8x256xf32, #tpu.memory_space<vmem>>, vector<1x8x256xf32>
      %59 = vector.shape_cast %58 : vector<1x8x256xf32> to vector<8x256xf32>
      %60 = vector.shape_cast %54 : vector<8x256xf32> to vector<1x8x256xf32>
      tpu.vector_store %arg8[%c1_56, %c0_57, %c0_58], %60 {strides = array<i32>} : memref<8x8x256xf32, #tpu.memory_space<vmem>>, vector<1x8x256xf32>,
      %c2_59 = arith.constant 2 : index
      %c0_60 = arith.constant 0 : index
      %c0_61 = arith.constant 0 : index
      %61 = vector.load %arg8[%c2_59, %c0_60, %c0_61] : memref<8x8x256xf32, #tpu.memory_space<vmem>>, vector<1x8x256xf32>
      %62 = vector.shape_cast %61 : vector<1x8x256xf32> to vector<8x256xf32>
      %63 = vector.shape_cast %54 : vector<8x256xf32> to vector<1x8x256xf32>
      tpu.vector_store %arg8[%c2_59, %c0_60, %c0_61], %63 {strides = array<i32>} : memref<8x8x256xf32, #tpu.memory_space<vmem>>, vector<1x8x256xf32>,
      %c3 = arith.constant 3 : index
      %c0_62 = arith.constant 0 : index
      %c0_63 = arith.constant 0 : index
      %64 = vector.load %arg8[%c3, %c0_62, %c0_63] : memref<8x8x256xf32, #tpu.memory_space<vmem>>, vector<1x8x256xf32>
      %65 = vector.shape_cast %64 : vector<1x8x256xf32> to vector<8x256xf32>
      %66 = vector.shape_cast %54 : vector<8x256xf32> to vector<1x8x256xf32>
      tpu.vector_store %arg8[%c3, %c0_62, %c0_63], %66 {strides = array<i32>} : memref<8x8x256xf32, #tpu.memory_space<vmem>>, vector<1x8x256xf32>,
      %c4 = arith.constant 4 : index
      %c0_64 = arith.constant 0 : index
      %c0_65 = arith.constant 0 : index
      %67 = vector.load %arg8[%c4, %c0_64, %c0_65] : memref<8x8x256xf32, #tpu.memory_space<vmem>>, vector<1x8x256xf32>
      %68 = vector.shape_cast %67 : vector<1x8x256xf32> to vector<8x256xf32>
      %69 = vector.shape_cast %54 : vector<8x256xf32> to vector<1x8x256xf32>
      tpu.vector_store %arg8[%c4, %c0_64, %c0_65], %69 {strides = array<i32>} : memref<8x8x256xf32, #tpu.memory_space<vmem>>, vector<1x8x256xf32>,
      %c5 = arith.constant 5 : index
      %c0_66 = arith.constant 0 : index
      %c0_67 = arith.constant 0 : index
      %70 = vector.load %arg8[%c5, %c0_66, %c0_67] : memref<8x8x256xf32, #tpu.memory_space<vmem>>, vector<1x8x256xf32>
      %71 = vector.shape_cast %70 : vector<1x8x256xf32> to vector<8x256xf32>
      %72 = vector.shape_cast %54 : vector<8x256xf32> to vector<1x8x256xf32>
      tpu.vector_store %arg8[%c5, %c0_66, %c0_67], %72 {strides = array<i32>} : memref<8x8x256xf32, #tpu.memory_space<vmem>>, vector<1x8x256xf32>,
      %c6 = arith.constant 6 : index
      %c0_68 = arith.constant 0 : index
      %c0_69 = arith.constant 0 : index
      %73 = vector.load %arg8[%c6, %c0_68, %c0_69] : memref<8x8x256xf32, #tpu.memory_space<vmem>>, vector<1x8x256xf32>
      %74 = vector.shape_cast %73 : vector<1x8x256xf32> to vector<8x256xf32>
      %75 = vector.shape_cast %54 : vector<8x256xf32> to vector<1x8x256xf32>
      tpu.vector_store %arg8[%c6, %c0_68, %c0_69], %75 {strides = array<i32>} : memref<8x8x256xf32, #tpu.memory_space<vmem>>, vector<1x8x256xf32>,
      %c7 = arith.constant 7 : index
      %c0_70 = arith.constant 0 : index
      %c0_71 = arith.constant 0 : index
      %76 = vector.load %arg8[%c7, %c0_70, %c0_71] : memref<8x8x256xf32, #tpu.memory_space<vmem>>, vector<1x8x256xf32>
      %77 = vector.shape_cast %76 : vector<1x8x256xf32> to vector<8x256xf32>
      %78 = vector.shape_cast %54 : vector<8x256xf32> to vector<1x8x256xf32>
      tpu.vector_store %arg8[%c7, %c0_70, %c0_71], %78 {strides = array<i32>} : memref<8x8x256xf32, #tpu.memory_space<vmem>>, vector<1x8x256xf32>,
    } else {
    }
    %c0 = arith.constant 0 : index
    %c0_1 = arith.constant 0 : index
    %c0_2 = arith.constant 0 : index
    %c0_3 = arith.constant 0 : index
    %3 = vector.load %arg3[%c0, %c0_1, %c0_2, %c0_3] : memref<1x1x16x384xbf16, #tpu.memory_space<vmem>>, vector<1x1x16x256xbf16>
    %4 = vector.shape_cast %3 : vector<1x1x16x256xbf16> to vector<16x256xbf16>
    %c0_4 = arith.constant 0 : index
    %c0_5 = arith.constant 0 : index
    %5 = vector.load %arg7[%c0_4, %c0_5] : memref<144x256xbf16, #tpu.memory_space<vmem>>, vector<16x256xbf16>
    tpu.vector_store %arg7[%c0_4, %c0_5], %4 {strides = array<i32>} : memref<144x256xbf16, #tpu.memory_space<vmem>>, vector<16x256xbf16>,
    %c0_6 = arith.constant 0 : index
    %c0_7 = arith.constant 0 : index
    %c0_8 = arith.constant 0 : index
    %c1 = arith.constant 1 : index
    %6 = vector.load %arg3[%c0_6, %c0_7, %c0_8, %c1] : memref<1x1x16x384xbf16, #tpu.memory_space<vmem>>, vector<1x1x16x256xbf16>
    %7 = vector.shape_cast %6 : vector<1x1x16x256xbf16> to vector<16x256xbf16>
    %c16 = arith.constant 16 : index
    %c0_9 = arith.constant 0 : index
    %8 = vector.load %arg7[%c16, %c0_9] : memref<144x256xbf16, #tpu.memory_space<vmem>>, vector<16x256xbf16>
    tpu.vector_store %arg7[%c16, %c0_9], %7 {strides = array<i32>} : memref<144x256xbf16, #tpu.memory_space<vmem>>, vector<16x256xbf16>,
    %c0_10 = arith.constant 0 : index
    %c0_11 = arith.constant 0 : index
    %c0_12 = arith.constant 0 : index
    %c2 = arith.constant 2 : index
    %9 = vector.load %arg3[%c0_10, %c0_11, %c0_12, %c2] : memref<1x1x16x384xbf16, #tpu.memory_space<vmem>>, vector<1x1x16x256xbf16>
    %10 = vector.shape_cast %9 : vector<1x1x16x256xbf16> to vector<16x256xbf16>
    %c32 = arith.constant 32 : index
    %c0_13 = arith.constant 0 : index
    %11 = vector.load %arg7[%c32, %c0_13] : memref<144x256xbf16, #tpu.memory_space<vmem>>, vector<16x256xbf16>
    tpu.vector_store %arg7[%c32, %c0_13], %10 {strides = array<i32>} : memref<144x256xbf16, #tpu.memory_space<vmem>>, vector<16x256xbf16>,
    %c0_14 = arith.constant 0 : index
    %c0_15 = arith.constant 0 : index
    %c0_16 = arith.constant 0 : index
    %c14 = arith.constant 14 : index
    %12 = vector.load %arg3[%c0_14, %c0_15, %c0_16, %c14] : memref<1x1x16x384xbf16, #tpu.memory_space<vmem>>, vector<1x1x16x256xbf16>
    %13 = vector.shape_cast %12 : vector<1x1x16x256xbf16> to vector<16x256xbf16>
    %c48 = arith.constant 48 : index
    %c0_17 = arith.constant 0 : index
    %14 = vector.load %arg7[%c48, %c0_17] : memref<144x256xbf16, #tpu.memory_space<vmem>>, vector<16x256xbf16>
    tpu.vector_store %arg7[%c48, %c0_17], %13 {strides = array<i32>} : memref<144x256xbf16, #tpu.memory_space<vmem>>, vector<16x256xbf16>,
    %c0_18 = arith.constant 0 : index
    %c0_19 = arith.constant 0 : index
    %c0_20 = arith.constant 0 : index
    %c15 = arith.constant 15 : index
    %15 = vector.load %arg3[%c0_18, %c0_19, %c0_20, %c15] : memref<1x1x16x384xbf16, #tpu.memory_space<vmem>>, vector<1x1x16x256xbf16>
    %16 = vector.shape_cast %15 : vector<1x1x16x256xbf16> to vector<16x256xbf16>
    %c64 = arith.constant 64 : index
    %c0_21 = arith.constant 0 : index
    %17 = vector.load %arg7[%c64, %c0_21] : memref<144x256xbf16, #tpu.memory_space<vmem>>, vector<16x256xbf16>
    tpu.vector_store %arg7[%c64, %c0_21], %16 {strides = array<i32>} : memref<144x256xbf16, #tpu.memory_space<vmem>>, vector<16x256xbf16>,
    %c0_22 = arith.constant 0 : index
    %c0_23 = arith.constant 0 : index
    %c0_24 = arith.constant 0 : index
    %c16_25 = arith.constant 16 : index
    %18 = vector.load %arg3[%c0_22, %c0_23, %c0_24, %c16_25] : memref<1x1x16x384xbf16, #tpu.memory_space<vmem>>, vector<1x1x16x256xbf16>
    %19 = vector.shape_cast %18 : vector<1x1x16x256xbf16> to vector<16x256xbf16>
    %c80 = arith.constant 80 : index
    %c0_26 = arith.constant 0 : index
    %20 = vector.load %arg7[%c80, %c0_26] : memref<144x256xbf16, #tpu.memory_space<vmem>>, vector<16x256xbf16>
    tpu.vector_store %arg7[%c80, %c0_26], %19 {strides = array<i32>} : memref<144x256xbf16, #tpu.memory_space<vmem>>, vector<16x256xbf16>,
    %c0_27 = arith.constant 0 : index
    %c0_28 = arith.constant 0 : index
    %c0_29 = arith.constant 0 : index
    %c28 = arith.constant 28 : index
    %21 = vector.load %arg3[%c0_27, %c0_28, %c0_29, %c28] : memref<1x1x16x384xbf16, #tpu.memory_space<vmem>>, vector<1x1x16x256xbf16>
    %22 = vector.shape_cast %21 : vector<1x1x16x256xbf16> to vector<16x256xbf16>
    %c96 = arith.constant 96 : index
    %c0_30 = arith.constant 0 : index
    %23 = vector.load %arg7[%c96, %c0_30] : memref<144x256xbf16, #tpu.memory_space<vmem>>, vector<16x256xbf16>
    tpu.vector_store %arg7[%c96, %c0_30], %22 {strides = array<i32>} : memref<144x256xbf16, #tpu.memory_space<vmem>>, vector<16x256xbf16>,
    %c0_31 = arith.constant 0 : index
    %c0_32 = arith.constant 0 : index
    %c0_33 = arith.constant 0 : index
    %c29 = arith.constant 29 : index
    %24 = vector.load %arg3[%c0_31, %c0_32, %c0_33, %c29] : memref<1x1x16x384xbf16, #tpu.memory_space<vmem>>, vector<1x1x16x256xbf16>
    %25 = vector.shape_cast %24 : vector<1x1x16x256xbf16> to vector<16x256xbf16>
    %c112 = arith.constant 112 : index
    %c0_34 = arith.constant 0 : index
    %26 = vector.load %arg7[%c112, %c0_34] : memref<144x256xbf16, #tpu.memory_space<vmem>>, vector<16x256xbf16>
    tpu.vector_store %arg7[%c112, %c0_34], %25 {strides = array<i32>} : memref<144x256xbf16, #tpu.memory_space<vmem>>, vector<16x256xbf16>,
    %c0_35 = arith.constant 0 : index
    %c0_36 = arith.constant 0 : index
    %c0_37 = arith.constant 0 : index
    %c30 = arith.constant 30 : index
    %27 = vector.load %arg3[%c0_35, %c0_36, %c0_37, %c30] : memref<1x1x16x384xbf16, #tpu.memory_space<vmem>>, vector<1x1x16x256xbf16>
    %28 = vector.shape_cast %27 : vector<1x1x16x256xbf16> to vector<16x256xbf16>
    %c128 = arith.constant 128 : index
    %c0_38 = arith.constant 0 : index
    %29 = vector.load %arg7[%c128, %c0_38] : memref<144x256xbf16, #tpu.memory_space<vmem>>, vector<16x256xbf16>
    tpu.vector_store %arg7[%c128, %c0_38], %28 {strides = array<i32>} : memref<144x256xbf16, #tpu.memory_space<vmem>>, vector<16x256xbf16>,
    %c0_39 = arith.constant 0 : index
    %c0_40 = arith.constant 0 : index
    %30 = vector.load %arg7[%c0_39, %c0_40] : memref<144x256xbf16, #tpu.memory_space<vmem>>, vector<144x256xbf16>
    %c0_i32_41 = arith.constant 0 : i32
    %31 = arith.subi %arg2, %c0_i32_41 : i32
    %c0_i32_42 = arith.constant 0 : i32
    %32 = arith.cmpi sge, %31, %c0_i32_42 : i32
    %c8_i32 = arith.constant 8 : i32
    %33 = arith.cmpi slt, %31, %c8_i32 : i32
    %34 = arith.andi %32, %33 : i1
    %35 = arith.extui %34 : i1 to i32
    %c0_i32_43 = arith.constant 0 : i32
    %36 = arith.cmpi ne, %35, %c0_i32_43 : i32
    scf.if %36 {
      %52 = arith.index_cast %31 : i32 to index
      %c0_51 = arith.constant 0 : index
      %c0_52 = arith.constant 0 : index
      %53 = vector.load %arg8[%52, %c0_51, %c0_52] : memref<8x8x256xf32, #tpu.memory_space<vmem>>, vector<1x8x256xf32>
      %54 = vector.shape_cast %53 : vector<1x8x256xf32> to vector<8x256xf32>
      %c0_53 = arith.constant 0 : index
      %c0_54 = arith.constant 0 : index
      %c0_55 = arith.constant 0 : index
      %55 = vector.load %arg4[%c0_53, %c0_54, %c0_55] : memref<3x8x144xbf16, #tpu.memory_space<vmem>>, vector<1x8x144xbf16>
      %56 = vector.shape_cast %55 : vector<1x8x144xbf16> to vector<8x144xbf16>
      %cst = arith.constant dense<0.000000e+00> : vector<8x256xf32>
      %57 = tpu.matmul %56, %30, %cst {dimension_numbers = #tpu.dot_dimension_numbers<[1], [0], [0], [1], [0, 0, 1, 1], [], []>} : vector<8x144xbf16>, vector<144x256xbf16>, vector<8x256xf32> -> vector<8x256xf32>
      %58 = arith.addf %54, %57 : vector<8x256xf32>
      %59 = arith.index_cast %31 : i32 to index
      %c0_56 = arith.constant 0 : index
      %c0_57 = arith.constant 0 : index
      %60 = vector.load %arg8[%59, %c0_56, %c0_57] : memref<8x8x256xf32, #tpu.memory_space<vmem>>, vector<1x8x256xf32>
      %61 = vector.shape_cast %60 : vector<1x8x256xf32> to vector<8x256xf32>
      %62 = vector.shape_cast %58 : vector<8x256xf32> to vector<1x8x256xf32>
      tpu.vector_store %arg8[%59, %c0_56, %c0_57], %62 {strides = array<i32>} : memref<8x8x256xf32, #tpu.memory_space<vmem>>, vector<1x8x256xf32>,
    } else {
    }
    %c1_i32 = arith.constant 1 : i32
    %37 = arith.subi %arg2, %c1_i32 : i32
    %c0_i32_44 = arith.constant 0 : i32
    %38 = arith.cmpi sge, %37, %c0_i32_44 : i32
    %c8_i32_45 = arith.constant 8 : i32
    %39 = arith.cmpi slt, %37, %c8_i32_45 : i32
    %40 = arith.andi %38, %39 : i1
    %41 = arith.extui %40 : i1 to i32
    %c0_i32_46 = arith.constant 0 : i32
    %42 = arith.cmpi ne, %41, %c0_i32_46 : i32
    scf.if %42 {
      %52 = arith.index_cast %37 : i32 to index
      %c0_51 = arith.constant 0 : index
      %c0_52 = arith.constant 0 : index
      %53 = vector.load %arg8[%52, %c0_51, %c0_52] : memref<8x8x256xf32, #tpu.memory_space<vmem>>, vector<1x8x256xf32>
      %54 = vector.shape_cast %53 : vector<1x8x256xf32> to vector<8x256xf32>
      %c1_53 = arith.constant 1 : index
      %c0_54 = arith.constant 0 : index
      %c0_55 = arith.constant 0 : index
      %55 = vector.load %arg4[%c1_53, %c0_54, %c0_55] : memref<3x8x144xbf16, #tpu.memory_space<vmem>>, vector<1x8x144xbf16>
      %56 = vector.shape_cast %55 : vector<1x8x144xbf16> to vector<8x144xbf16>
      %cst = arith.constant dense<0.000000e+00> : vector<8x256xf32>
      %57 = tpu.matmul %56, %30, %cst {dimension_numbers = #tpu.dot_dimension_numbers<[1], [0], [0], [1], [0, 0, 1, 1], [], []>} : vector<8x144xbf16>, vector<144x256xbf16>, vector<8x256xf32> -> vector<8x256xf32>
      %58 = arith.addf %54, %57 : vector<8x256xf32>
      %59 = arith.index_cast %37 : i32 to index
      %c0_56 = arith.constant 0 : index
      %c0_57 = arith.constant 0 : index
      %60 = vector.load %arg8[%59, %c0_56, %c0_57] : memref<8x8x256xf32, #tpu.memory_space<vmem>>, vector<1x8x256xf32>
      %61 = vector.shape_cast %60 : vector<1x8x256xf32> to vector<8x256xf32>
      %62 = vector.shape_cast %58 : vector<8x256xf32> to vector<1x8x256xf32>
      tpu.vector_store %arg8[%59, %c0_56, %c0_57], %62 {strides = array<i32>} : memref<8x8x256xf32, #tpu.memory_space<vmem>>, vector<1x8x256xf32>,
    } else {
    }
    %c2_i32 = arith.constant 2 : i32
    %43 = arith.subi %arg2, %c2_i32 : i32
    %c0_i32_47 = arith.constant 0 : i32
    %44 = arith.cmpi sge, %43, %c0_i32_47 : i32
    %c8_i32_48 = arith.constant 8 : i32
    %45 = arith.cmpi slt, %43, %c8_i32_48 : i32
    %46 = arith.andi %44, %45 : i1
    %47 = arith.extui %46 : i1 to i32
    %c0_i32_49 = arith.constant 0 : i32
    %48 = arith.cmpi ne, %47, %c0_i32_49 : i32
    scf.if %48 {
      %52 = arith.index_cast %43 : i32 to index
      %c0_51 = arith.constant 0 : index
      %c0_52 = arith.constant 0 : index
      %53 = vector.load %arg8[%52, %c0_51, %c0_52] : memref<8x8x256xf32, #tpu.memory_space<vmem>>, vector<1x8x256xf32>
      %54 = vector.shape_cast %53 : vector<1x8x256xf32> to vector<8x256xf32>
      %c2_53 = arith.constant 2 : index
      %c0_54 = arith.constant 0 : index
      %c0_55 = arith.constant 0 : index
      %55 = vector.load %arg4[%c2_53, %c0_54, %c0_55] : memref<3x8x144xbf16, #tpu.memory_space<vmem>>, vector<1x8x144xbf16>
      %56 = vector.shape_cast %55 : vector<1x8x144xbf16> to vector<8x144xbf16>
      %cst = arith.constant dense<0.000000e+00> : vector<8x256xf32>
      %57 = tpu.matmul %56, %30, %cst {dimension_numbers = #tpu.dot_dimension_numbers<[1], [0], [0], [1], [0, 0, 1, 1], [], []>} : vector<8x144xbf16>, vector<144x256xbf16>, vector<8x256xf32> -> vector<8x256xf32>
      %58 = arith.addf %54, %57 : vector<8x256xf32>
      %59 = arith.index_cast %43 : i32 to index
      %c0_56 = arith.constant 0 : index
      %c0_57 = arith.constant 0 : index
      %60 = vector.load %arg8[%59, %c0_56, %c0_57] : memref<8x8x256xf32, #tpu.memory_space<vmem>>, vector<1x8x256xf32>
      %61 = vector.shape_cast %60 : vector<1x8x256xf32> to vector<8x256xf32>
      %62 = vector.shape_cast %58 : vector<8x256xf32> to vector<1x8x256xf32>
      tpu.vector_store %arg8[%59, %c0_56, %c0_57], %62 {strides = array<i32>} : memref<8x8x256xf32, #tpu.memory_space<vmem>>, vector<1x8x256xf32>,
    } else {
    }
    %c9_i32 = arith.constant 9 : i32
    %49 = arith.cmpi eq, %arg2, %c9_i32 : i32
    %50 = arith.extui %49 : i1 to i32
    %c0_i32_50 = arith.constant 0 : i32
    %51 = arith.cmpi ne, %50, %c0_i32_50 : i32
    scf.if %51 {
      %c0_51 = arith.constant 0 : index
      %c0_52 = arith.constant 0 : index
      %c0_53 = arith.constant 0 : index
      %52 = vector.load %arg8[%c0_51, %c0_52, %c0_53] : memref<8x8x256xf32, #tpu.memory_space<vmem>>, vector<1x8x256xf32>
      %53 = vector.shape_cast %52 : vector<1x8x256xf32> to vector<8x256xf32>
      %c0_54 = arith.constant 0 : index
      %c0_55 = arith.constant 0 : index
      %c0_56 = arith.constant 0 : index
      %54 = vector.load %arg6[%c0_54, %c0_55, %c0_56] : memref<1x8x2048xf32, #tpu.memory_space<vmem>>, vector<1x8x256xf32>
      %55 = vector.shape_cast %54 : vector<1x8x256xf32> to vector<8x256xf32>
      %56 = vector.shape_cast %53 : vector<8x256xf32> to vector<1x8x256xf32>
      tpu.vector_store %arg6[%c0_54, %c0_55, %c0_56], %56 {strides = array<i32>} : memref<1x8x2048xf32, #tpu.memory_space<vmem>>, vector<1x8x256xf32>,
      %c1_57 = arith.constant 1 : index
      %c0_58 = arith.constant 0 : index
      %c0_59 = arith.constant 0 : index
      %57 = vector.load %arg8[%c1_57, %c0_58, %c0_59] : memref<8x8x256xf32, #tpu.memory_space<vmem>>, vector<1x8x256xf32>
      %58 = vector.shape_cast %57 : vector<1x8x256xf32> to vector<8x256xf32>
      %c0_60 = arith.constant 0 : index
      %c0_61 = arith.constant 0 : index
      %c256 = arith.constant 256 : index
      %59 = vector.load %arg6[%c0_60, %c0_61, %c256] : memref<1x8x2048xf32, #tpu.memory_space<vmem>>, vector<1x8x256xf32>
      %60 = vector.shape_cast %59 : vector<1x8x256xf32> to vector<8x256xf32>
      %61 = vector.shape_cast %58 : vector<8x256xf32> to vector<1x8x256xf32>
      tpu.vector_store %arg6[%c0_60, %c0_61, %c256], %61 {strides = array<i32>} : memref<1x8x2048xf32, #tpu.memory_space<vmem>>, vector<1x8x256xf32>,
      %c2_62 = arith.constant 2 : index
      %c0_63 = arith.constant 0 : index
      %c0_64 = arith.constant 0 : index
      %62 = vector.load %arg8[%c2_62, %c0_63, %c0_64] : memref<8x8x256xf32, #tpu.memory_space<vmem>>, vector<1x8x256xf32>
      %63 = vector.shape_cast %62 : vector<1x8x256xf32> to vector<8x256xf32>
      %c0_65 = arith.constant 0 : index
      %c0_66 = arith.constant 0 : index
      %c512 = arith.constant 512 : index
      %64 = vector.load %arg6[%c0_65, %c0_66, %c512] : memref<1x8x2048xf32, #tpu.memory_space<vmem>>, vector<1x8x256xf32>
      %65 = vector.shape_cast %64 : vector<1x8x256xf32> to vector<8x256xf32>
      %66 = vector.shape_cast %63 : vector<8x256xf32> to vector<1x8x256xf32>
      tpu.vector_store %arg6[%c0_65, %c0_66, %c512], %66 {strides = array<i32>} : memref<1x8x2048xf32, #tpu.memory_space<vmem>>, vector<1x8x256xf32>,
      %c3 = arith.constant 3 : index
      %c0_67 = arith.constant 0 : index
      %c0_68 = arith.constant 0 : index
      %67 = vector.load %arg8[%c3, %c0_67, %c0_68] : memref<8x8x256xf32, #tpu.memory_space<vmem>>, vector<1x8x256xf32>
      %68 = vector.shape_cast %67 : vector<1x8x256xf32> to vector<8x256xf32>
      %c0_69 = arith.constant 0 : index
      %c0_70 = arith.constant 0 : index
      %c768 = arith.constant 768 : index
      %69 = vector.load %arg6[%c0_69, %c0_70, %c768] : memref<1x8x2048xf32, #tpu.memory_space<vmem>>, vector<1x8x256xf32>
      %70 = vector.shape_cast %69 : vector<1x8x256xf32> to vector<8x256xf32>
      %71 = vector.shape_cast %68 : vector<8x256xf32> to vector<1x8x256xf32>
      tpu.vector_store %arg6[%c0_69, %c0_70, %c768], %71 {strides = array<i32>} : memref<1x8x2048xf32, #tpu.memory_space<vmem>>, vector<1x8x256xf32>,
      %c4 = arith.constant 4 : index
      %c0_71 = arith.constant 0 : index
      %c0_72 = arith.constant 0 : index
      %72 = vector.load %arg8[%c4, %c0_71, %c0_72] : memref<8x8x256xf32, #tpu.memory_space<vmem>>, vector<1x8x256xf32>
      %73 = vector.shape_cast %72 : vector<1x8x256xf32> to vector<8x256xf32>
      %c0_73 = arith.constant 0 : index
      %c0_74 = arith.constant 0 : index
      %c1024 = arith.constant 1024 : index
      %74 = vector.load %arg6[%c0_73, %c0_74, %c1024] : memref<1x8x2048xf32, #tpu.memory_space<vmem>>, vector<1x8x256xf32>
      %75 = vector.shape_cast %74 : vector<1x8x256xf32> to vector<8x256xf32>
      %76 = vector.shape_cast %73 : vector<8x256xf32> to vector<1x8x256xf32>
      tpu.vector_store %arg6[%c0_73, %c0_74, %c1024], %76 {strides = array<i32>} : memref<1x8x2048xf32, #tpu.memory_space<vmem>>, vector<1x8x256xf32>,
      %c5 = arith.constant 5 : index
      %c0_75 = arith.constant 0 : index
      %c0_76 = arith.constant 0 : index
      %77 = vector.load %arg8[%c5, %c0_75, %c0_76] : memref<8x8x256xf32, #tpu.memory_space<vmem>>, vector<1x8x256xf32>
      %78 = vector.shape_cast %77 : vector<1x8x256xf32> to vector<8x256xf32>
      %c0_77 = arith.constant 0 : index
      %c0_78 = arith.constant 0 : index
      %c1280 = arith.constant 1280 : index
      %79 = vector.load %arg6[%c0_77, %c0_78, %c1280] : memref<1x8x2048xf32, #tpu.memory_space<vmem>>, vector<1x8x256xf32>
      %80 = vector.shape_cast %79 : vector<1x8x256xf32> to vector<8x256xf32>
      %81 = vector.shape_cast %78 : vector<8x256xf32> to vector<1x8x256xf32>
      tpu.vector_store %arg6[%c0_77, %c0_78, %c1280], %81 {strides = array<i32>} : memref<1x8x2048xf32, #tpu.memory_space<vmem>>, vector<1x8x256xf32>,
      %c6 = arith.constant 6 : index
      %c0_79 = arith.constant 0 : index
      %c0_80 = arith.constant 0 : index
      %82 = vector.load %arg8[%c6, %c0_79, %c0_80] : memref<8x8x256xf32, #tpu.memory_space<vmem>>, vector<1x8x256xf32>
      %83 = vector.shape_cast %82 : vector<1x8x256xf32> to vector<8x256xf32>
      %c0_81 = arith.constant 0 : index
      %c0_82 = arith.constant 0 : index
      %c1536 = arith.constant 1536 : index
      %84 = vector.load %arg6[%c0_81, %c0_82, %c1536] : memref<1x8x2048xf32, #tpu.memory_space<vmem>>, vector<1x8x256xf32>
      %85 = vector.shape_cast %84 : vector<1x8x256xf32> to vector<8x256xf32>
      %86 = vector.shape_cast %83 : vector<8x256xf32> to vector<1x8x256xf32>
      tpu.vector_store %arg6[%c0_81, %c0_82, %c1536], %86 {strides = array<i32>} : memref<1x8x2048xf32, #tpu.memory_space<vmem>>, vector<1x8x256xf32>,
      %c7 = arith.constant 7 : index
      %c0_83 = arith.constant 0 : index
      %c0_84 = arith.constant 0 : index
      %87 = vector.load %arg8[%c7, %c0_83, %c0_84] : memref<8x8x256xf32, #tpu.memory_space<vmem>>, vector<1x8x256xf32>
      %88 = vector.shape_cast %87 : vector<1x8x256xf32> to vector<8x256xf32>
      %c0_85 = arith.constant 0 : index
      %c0_86 = arith.constant 0 : index
      %c1792 = arith.constant 1792 : index
      %89 = vector.load %arg6[%c0_85, %c0_86, %c1792] : memref<1x8x2048xf32, #tpu.memory_space<vmem>>, vector<1x8x256xf32>
      %90 = vector.shape_cast %89 : vector<1x8x256xf32> to vector<8x256xf32>
      %91 = vector.shape_cast %88 : vector<8x256xf32> to vector<1x8x256xf32>
      tpu.vector_store %arg6[%c0_85, %c0_86, %c1792], %91 {strides = array<i32>} : memref<1x8x2048xf32, #tpu.memory_space<vmem>>, vector<1x8x256xf32>,
    } else {
    }
    return
  }
  func.func @transform_0(%arg0: i32, %arg1: i32, %arg2: i32) -> (i32, i32, i32, i32) {
    %c8_i32 = arith.constant 8 : i32
    %0 = arith.muli %arg1, %c8_i32 : i32
    %1 = arith.addi %0, %arg2 : i32
    %c0_i32 = arith.constant 0 : i32
    %c0_i32_0 = arith.constant 0 : i32
    %c0_i32_1 = arith.constant 0 : i32
    return %arg0, %1, %c0_i32, %c0_i32_0 : i32, i32, i32, i32
  }
  func.func @transform_1(%arg0: i32, %arg1: i32, %arg2: i32) -> (i32, i32, i32) {
    %c0_i32 = arith.constant 0 : i32
    %c0_i32_0 = arith.constant 0 : i32
    %c0_i32_1 = arith.constant 0 : i32
    %c0_i32_2 = arith.constant 0 : i32
    return %c0_i32, %c0_i32_0, %c0_i32_1 : i32, i32, i32
  }
  func.func @transform_2(%arg0: i32, %arg1: i32, %arg2: i32) -> (i32, i32) {
    %c0_i32 = arith.constant 0 : i32
    %c0_i32_0 = arith.constant 0 : i32
    %c0_i32_1 = arith.constant 0 : i32
    return %c0_i32, %c0_i32_0 : i32, i32
  }
  func.func @transform_3(%arg0: i32, %arg1: i32, %arg2: i32) -> (i32, i32, i32) {
    %c0_i32 = arith.constant 0 : i32
    %c0_i32_0 = arith.constant 0 : i32
    return %arg0, %c0_i32, %arg1 : i32, i32, i32
  }
}

</mosaic_0001>

<llo_original>
// kernel: conv_transpose3d_same.1
$region0: #{conv_transpose3d_same.1}
  #allocation0 [shape = 'u32[]', space=smem, size = 0x4, offset = 0x4, fixed_abs, tag = 'smem constant byte address 0x4 - core index']
  #allocation1 [shape = 'u32[144,128]{1,0:T(1,128)}', space=vmem, size = 0x12000, scoped, tag = 'internal scratch']
  #allocation2 [shape = 'bf16[144,256]{1,0:T(8,128)(2,1)}', space=vmem, size = 0x12000, scoped, tag = 'scratch operand']
  #allocation3 [shape = 'f32[8,8,256]{2,1,0:T(8,128)}', space=vmem, size = 0x10000, scoped, tag = 'scratch operand']
  %s0 = inlined_call_operand.vmem [shape: bf16[2,18,16,384], index: 0, kind: input, shape index: {}]
  %s1 = inlined_call_operand.vmem [shape: bf16[3,8,144], index: 1, kind: input, shape index: {}]
  %s2 = inlined_call_operand.vmem [shape: f32[8,1], index: 2, kind: input, shape index: {}]
  %s3 = inlined_call_operand.vmem [shape: f32[2,8,4096], index: 3, kind: output, shape index: {}]
  %s4 = sld [smem:[#allocation0]]
  $region65: #{conv_transpose3d_same.1} parent=0
    _
  %s6 = ssub.s32 1, %s4
  %s7 = scalar_select 0, %s6, %s4
  loop: start=0, step=1, limit=42
  $region2: #{conv_transpose3d_same.1} parent=0 // loop_pre_header
    _
  $region3: #{conv_transpose3d_same.1} parent=0 // loop_header
    %s9 = sphi 0, %s13
    %p10 = scmp.ge.s32.totalorder %s9, 42
    %s16 = sphi 0, %s35
    %s17 = sphi 0, %s31
    %s18 = sphi 0, %s27
    %s19 = sphi 0, %s16
    %s20 = sphi 0, %s17
    %s21 = sphi 0, %s18
    %s22 = sphi 0, %s19
    %s23 = sphi 0, %s20
    %s24 = sphi 0, %s21
    %s44 = sphi 0, %s46
    %s47 = sphi 0, %s44
    %s48 = sphi 0, %s47
    %s64 = sphi 0, %s48
    %s68 = sphi 0, %s68
    %s70 = sphi 0, %s68
    %s71 = sphi 0, %s70
    %s85 = sphi 0, %s71
    %s89 = sphi 0, %s89
    %s91 = sphi 0, %s89
    %s92 = sphi 0, %s91
    %s106 = sphi 0, %s92
    %s114 = sphi 0, %s116
    %s117 = sphi 0, %s114
    %s118 = sphi 0, %s117
    %s134 = sphi 0, %s118
  $region4: #{conv_transpose3d_same.1} parent=0 // loop_header_branch
    %12 = sbr.rel (%p10) target = $region8
  $region5: #{conv_transpose3d_same.1} parent=0 // loop_body
    %s14 = ssub.s32 %s9, 1
    %s15 = ssub.s32 %s9, 2
    %s25 = sadd.s32 1, %s18
    %p26 = scmp.ge.s32.totalorder %s25, 10
    %s27 = scalar_select %p26, 0, %s25
    %s28 = sadd.s32 1, %s17
    %s29 = scalar_select %p26, %s28, %s17
    %p30 = scmp.ge.s32.totalorder %s29, 2
    %s31 = scalar_select %p30, 0, %s29
    %s32 = sadd.s32 1, %s16
    %s33 = scalar_select %p30, %s32, %s16
    %p34 = scmp.ge.s32.totalorder %s33, 2
    %s35 = scalar_select %p34, 0, %s33
    %s36 = smul.u32 %s17, 8
    %s37 = sadd.s32 %s36, %s18
    %s38 = smul.u32 %s31, 8
    %s39 = sadd.s32 %s38, %s27
    %s40 = ssub.s32 %s16, %s35
    %s41 = ssub.s32 %s37, %s39
    %s42 = sor.u32 %s40, %s41
    %p43 = scmp.eq.s32.totalorder %s42, 0
    %s45 = sadd.s32 %s44, 1
    %s46 = scalar_select %p43, %s44, %s45
    %p49 = pneg %p43
    %p50 = scmp.eq.s32.totalorder %s9, 39
    %p51 = por %p49, %p50
    %p52 = scmp.ne.s32.totalorder %s44, %s47
    %p53 = scmp.eq.s32.totalorder %s9, 0
    %p54 = por %p52, %p53
    %p55 = scmp.ne.s32.totalorder %s44, %s47
    %p56 = scmp.eq.s32.totalorder %s14, 39
    %p57 = por %p55, %p56
    %p58 = scmp.ne.s32.totalorder %s47, %s48
    %p59 = scmp.eq.s32.totalorder %s14, 0
    %p60 = por %p58, %p59
    %p61 = scmp.ne.s32.totalorder %s47, %s48
    %p62 = scmp.eq.s32.totalorder %s15, 39
    %p63 = por %p61, %p62
    %p65 = scmp.ne.s32.totalorder %s48, %s64
    %p66 = scmp.eq.s32.totalorder %s15, 0
    %p67 = por %p65, %p66
    %s69 = sadd.s32 %s68, 1
    %p72 = scmp.eq.s32.totalorder %s9, 39
    %p73 = scmp.ne.s32.totalorder %s68, %s70
    %p74 = scmp.eq.s32.totalorder %s9, 0
    %p75 = por %p73, %p74
    %p76 = scmp.ne.s32.totalorder %s68, %s70
    %p77 = scmp.eq.s32.totalorder %s14, 39
    %p78 = por %p76, %p77
    %p79 = scmp.ne.s32.totalorder %s70, %s71
    %p80 = scmp.eq.s32.totalorder %s14, 0
    %p81 = por %p79, %p80
    %p82 = scmp.ne.s32.totalorder %s70, %s71
    %p83 = scmp.eq.s32.totalorder %s15, 39
    %p84 = por %p82, %p83
    %p86 = scmp.ne.s32.totalorder %s71, %s85
    %p87 = scmp.eq.s32.totalorder %s15, 0
    %p88 = por %p86, %p87
    %s90 = sadd.s32 %s89, 1
    %p93 = scmp.eq.s32.totalorder %s9, 39
    %p94 = scmp.ne.s32.totalorder %s89, %s91
    %p95 = scmp.eq.s32.totalorder %s9, 0
    %p96 = por %p94, %p95
    %p97 = scmp.ne.s32.totalorder %s89, %s91
    %p98 = scmp.eq.s32.totalorder %s14, 39
    %p99 = por %p97, %p98
    %p100 = scmp.ne.s32.totalorder %s91, %s92
    %p101 = scmp.eq.s32.totalorder %s14, 0
    %p102 = por %p100, %p101
    %p103 = scmp.ne.s32.totalorder %s91, %s92
    %p104 = scmp.eq.s32.totalorder %s15, 39
    %p105 = por %p103, %p104
    %p107 = scmp.ne.s32.totalorder %s92, %s106
    %p108 = scmp.eq.s32.totalorder %s15, 0
    %p109 = por %p107, %p108
    %s110 = ssub.s32 %s16, %s35
    %s111 = ssub.s32 %s17, %s31
    %s112 = sor.u32 %s110, %s111
    %p113 = scmp.eq.s32.totalorder %s112, 0
    %s115 = sadd.s32 %s114, 1
    %s116 = scalar_select %p113, %s114, %s115
    %p119 = pneg %p113
    %p120 = scmp.eq.s32.totalorder %s9, 39
    %p121 = por %p119, %p120
    %p122 = scmp.ne.s32.totalorder %s114, %s117
    %p123 = scmp.eq.s32.totalorder %s9, 0
    %p124 = por %p122, %p123
    %p125 = scmp.ne.s32.totalorder %s114, %s117
    %p126 = scmp.eq.s32.totalorder %s14, 39
    %p127 = por %p125, %p126
    %p128 = scmp.ne.s32.totalorder %s117, %s118
    %p129 = scmp.eq.s32.totalorder %s14, 0
    %p130 = por %p128, %p129
    %p131 = scmp.ne.s32.totalorder %s117, %s118
    %p132 = scmp.eq.s32.totalorder %s15, 39
    %p133 = por %p131, %p132
    %p135 = scmp.ne.s32.totalorder %s118, %s134
    %p136 = scmp.eq.s32.totalorder %s15, 0
    %p137 = por %p135, %p136
    %p138 = scmp.le.s32.totalorder 1, %s9
    %p139 = scmp.lt.s32.totalorder %s9, 41
    %p140 = pnand %p138, %p139
    %p141 = pneg %p140
    // Predicated region
    $region9: #{conv_transpose3d_same.1} parent=5 // pred_check
      _
    $region10: #{conv_transpose3d_same.1} parent=5 // pred_check_branch
      %143 = sbr.rel (%p140) target = $region12
    $region11: #{conv_transpose3d_same.1} parent=5 // pred_region
      %s144 = ssub.s32 %s9, 1
      // Predicated region
      $region13: #{conv_transpose3d_same.1} parent=11 // pred_check
        %p145 = pneg %p81
      $region14: #{conv_transpose3d_same.1} parent=11 // pred_check_branch
        %147 = sbr.rel (%p145) target = $region16
      $region15: #{conv_transpose3d_same.1} parent=11 // pred_region
        _
      $region16: #{conv_transpose3d_same.1} parent=11 // pred_fallthru
        _
      // Predicated region
      $region17: #{conv_transpose3d_same.1} parent=11 // pred_check
        %p148 = pneg %p102
      $region18: #{conv_transpose3d_same.1} parent=11 // pred_check_branch
        %150 = sbr.rel (%p148) target = $region20
      $region19: #{conv_transpose3d_same.1} parent=11 // pred_region
        _
      $region20: #{conv_transpose3d_same.1} parent=11 // pred_fallthru
        _
    $region12: #{conv_transpose3d_same.1} parent=5 // pred_fallthru
      _
    %p151 = scmp.lt.s32.totalorder %s9, 40
    // Predicated region
    $region21: #{conv_transpose3d_same.1} parent=5 // pred_check
      %p152 = pneg %p151
    $region22: #{conv_transpose3d_same.1} parent=5 // pred_check_branch
      %154 = sbr.rel (%p152) target = $region24
    $region23: #{conv_transpose3d_same.1} parent=5 // pred_region
      // Predicated region
      $region25: #{conv_transpose3d_same.1} parent=23 // pred_check
        %p155 = pneg %p54
      $region26: #{conv_transpose3d_same.1} parent=23 // pred_check_branch
        %157 = sbr.rel (%p155) target = $region28
      $region27: #{conv_transpose3d_same.1} parent=23 // pred_region
        %s158 = smul.u32 %s17, 8
        %s159 = sadd.s32 %s158, %s18
        %p160 = scmp.lt.s32.totalorder %s16, 1
        %s161 = scalar_select %p160, %s16, 1
        %p162 = scmp.lt.s32.totalorder %s159, 17
        %s163 = scalar_select %p162, %s159, 17
        %s164 = smul.addr %s163, 6
        %s165 = smul.addr %s161, 108
        %s166 = sadd.s32 %s164, %s165
        %s167 = smul.addr %s166, 4
        %s168 = scalar_lea.vmem %s0, %s167
        %s169 = smul.u32 %s17, 8
        %s170 = sadd.s32 %s169, %s18
      $region28: #{conv_transpose3d_same.1} parent=23 // pred_fallthru
        _
    $region24: #{conv_transpose3d_same.1} parent=5 // pred_fallthru
      _
    %p171 = scmp.le.s32.totalorder 1, %s9
    %p172 = scmp.lt.s32.totalorder %s9, 41
    %p173 = pnand %p171, %p172
    %p174 = pneg %p173
    // Predicated region
    $region29: #{conv_transpose3d_same.1} parent=5 // pred_check
      _
    $region30: #{conv_transpose3d_same.1} parent=5 // pred_check_branch
      %176 = sbr.rel (%p173) target = $region32
    $region31: #{conv_transpose3d_same.1} parent=5 // pred_region
      %s177 = ssub.s32 %s9, 1
      %s178 = smul.u32 %s20, 8
      %s179 = sadd.s32 %s178, %s21
      %p180 = scmp.lt.s32.totalorder %s19, 1
      %s181 = scalar_select %p180, %s19, 1
      %p182 = scmp.lt.s32.totalorder %s179, 17
      %s183 = scalar_select %p182, %s179, 17
      %s184 = smul.addr %s183, 6
      %s185 = smul.addr %s181, 108
      %s186 = sadd.s32 %s184, %s185
      %s187 = smul.addr %s186, 4
      %s188 = scalar_lea.vmem %s0, %s187
      %p189 = pneg %p60
      %p190 = pneg %p57
      %p191 = pneg %p81
      %p192 = pneg %p78
      %p193 = pneg %p102
      %p194 = pneg %p99
      %p195 = pneg %p130
      %p196 = pneg %p127
      %s197 = smul.u32 16, %s20
      %p198 = scmp.lt.s32.totalorder %s19, 1
      %s199 = scalar_select %p198, %s19, 1
      %p200 = scmp.lt.s32.totalorder %s197, 31
      %s201 = scalar_select %p200, %s197, 31
      %s202 = smul.addr %s199, 32
      %s203 = sadd.s32 %s201, %s202
      %s204 = smul.addr %s203, 8
      %s205 = scalar_lea.vmem %s3, %s204
      %s206 = smul.u32 %s20, 8
      %s207 = sadd.s32 %s206, %s21
      %p208 = scmp.lt.s32.totalorder %s19, 1
      %s209 = scalar_select %p208, %s19, 1
      %p210 = scmp.lt.s32.totalorder %s207, 17
      %s211 = scalar_select %p210, %s207, 17
      %s212 = smul.addr %s211, 6
      %s213 = smul.addr %s209, 108
      %s214 = sadd.s32 %s212, %s213
      %s215 = smul.addr %s214, 4
      %s216 = scalar_lea.vmem %s0, %s215
      %s217 = smul.u32 %s20, 8
      %s218 = sadd.s32 %s217, %s21
      %s219 = smul.u32 16, %s20
      %p220 = scmp.lt.s32.totalorder %s19, 1
      %s221 = scalar_select %p220, %s19, 1
      %p222 = scmp.lt.s32.totalorder %s219, 31
      %s223 = scalar_select %p222, %s219, 31
      %s224 = smul.addr %s221, 32
      %s225 = sadd.s32 %s223, %s224
      %s226 = smul.addr %s225, 8
      %s227 = scalar_lea.vmem %s3, %s226
      %s228 = smul.u32 16, %s20
      %p230 = scmp.eq.s32.totalorder %s21, 0
      // Predicated region
      $region33: #{conv_transpose3d_same.1} parent=31 // pred_check
        %p231 = pneg %p230
      $region34: #{conv_transpose3d_same.1} parent=31 // pred_check_branch
        %233 = sbr.rel (%p231) target = $region36
      $region35: #{conv_transpose3d_same.1} parent=31 // pred_region
        %v234 = vld [vmem:[%s2] sm:$0xff]
        %236 = vset.pattern.permute.xlu0 0
        %237 = vperm.xlu0 %236, %v234
        %v238 = vpop.permute.xlu0 %237
        %240 = vst [vmem:[#allocation3] sm:$0xff] %v238
        %241 = vst [vmem:[#allocation3 + $0x8] sm:$0xff] %v238
        %s242 = scalar_lea.vmem [#allocation3], 16
        %243 = vst [vmem:[%s242] sm:$0xff] %v238
        %244 = vst [vmem:[%s242 + $0x8] sm:$0xff] %v238
        %s245 = scalar_lea.vmem [#allocation3], 32
        %246 = vst [vmem:[%s245] sm:$0xff] %v238
        %247 = vst [vmem:[%s245 + $0x8] sm:$0xff] %v238
        %s248 = scalar_lea.vmem [#allocation3], 48
        %249 = vst [vmem:[%s248] sm:$0xff] %v238
        %250 = vst [vmem:[%s248 + $0x8] sm:$0xff] %v238
        %s251 = scalar_lea.vmem [#allocation3], 64
        %252 = vst [vmem:[%s251] sm:$0xff] %v238
        %253 = vst [vmem:[%s251 + $0x8] sm:$0xff] %v238
        %s254 = scalar_lea.vmem [#allocation3], 80
        %255 = vst [vmem:[%s254] sm:$0xff] %v238
        %256 = vst [vmem:[%s254 + $0x8] sm:$0xff] %v238
        %s257 = scalar_lea.vmem [#allocation3], 96
        %258 = vst [vmem:[%s257] sm:$0xff] %v238
        %259 = vst [vmem:[%s257 + $0x8] sm:$0xff] %v238
        %s260 = scalar_lea.vmem [#allocation3], 112
        %261 = vst [vmem:[%s260] sm:$0xff] %v238
        %262 = vst [vmem:[%s260 + $0x8] sm:$0xff] %v238
      $region36: #{conv_transpose3d_same.1} parent=31 // pred_fallthru
        _
      %v263 = vld [vmem:[%s216] sm:$0xff]
      %v264 = vld [vmem:[%s216 + $0xc] sm:$0xff]
      %265 = vst [vmem:[#allocation2] sm:$0xff] %v263
      %266 = vst [vmem:[#allocation2 + $0x8] sm:$0xff] %v264
      %v267 = vld [vmem:[%s216] sm:$0xff]
      %v268 = vld [vmem:[%s216 + $0x8] sm:$0xf]
      %v269 = vld [vmem:[%s216 + $0xc] sm:$0xff]
      %v270 = vld [vmem:[%s216 + $0x14] sm:$0xf]
      %275 = vrot.lane.b32.xlu0 %v267, 127
      %v276 = vpop.permute.xlu0 %275
      %277 = vrot.lane.b32.xlu0 %v268, 127
      %v278 = vpop.permute.xlu0 %277
      %279 = vrot.lane.b32.xlu0 %v269, 127
      %v280 = vpop.permute.xlu0 %279
      %281 = vrot.lane.b32.xlu0 %v270, 127
      %v282 = vpop.permute.xlu0 %281
      %v283 = vrot.slane %v276, 4
      %v284 = vrot.slane %v278, 4
      %v285 = vrot.slane %v280, 4
      %v286 = vrot.slane %v282, 4
      %vm287 = vcmask 1043456
      %v288 = vsel %vm287, %v283, %v284
      %vm289 = vcmask 1039360
      %v290 = vsel %vm289, %v276, %v288
      %v291 = vsel %vm287, %v285, %v286
      %v292 = vsel %vm289, %v280, %v291
      %295 = vst [vmem:[#allocation2 + $0x10] sm:$0xff] %v290
      %296 = vst [vmem:[#allocation2 + $0x18] sm:$0xff] %v292
      %v297 = vld [vmem:[%s216] sm:$0xff]
      %v298 = vld [vmem:[%s216 + $0x8] sm:$0xf]
      %v299 = vld [vmem:[%s216 + $0xc] sm:$0xff]
      %v300 = vld [vmem:[%s216 + $0x14] sm:$0xf]
      %305 = vrot.lane.b32.xlu0 %v297, 126
      %v306 = vpop.permute.xlu0 %305
      %307 = vrot.lane.b32.xlu0 %v298, 126
      %v308 = vpop.permute.xlu0 %307
      %309 = vrot.lane.b32.xlu0 %v299, 126
      %v310 = vpop.permute.xlu0 %309
      %311 = vrot.lane.b32.xlu0 %v300, 126
      %v312 = vpop.permute.xlu0 %311
      %v313 = vrot.slane %v306, 4
      %v314 = vrot.slane %v308, 4
      %v315 = vrot.slane %v310, 4
      %v316 = vrot.slane %v312, 4
      %v317 = vsel %vm287, %v313, %v314
      %vm318 = vcmask 1031168
      %v319 = vsel %vm318, %v306, %v317
      %v320 = vsel %vm287, %v315, %v316
      %v321 = vsel %vm318, %v310, %v320
      %324 = vst [vmem:[#allocation2 + $0x20] sm:$0xff] %v319
      %325 = vst [vmem:[#allocation2 + $0x28] sm:$0xff] %v321
      %v326 = vld [vmem:[%s216] sm:$0xff]
      %v327 = vld [vmem:[%s216 + $0x8] sm:$0xf]
      %v328 = vld [vmem:[%s216 + $0xc] sm:$0xff]
      %v329 = vld [vmem:[%s216 + $0x14] sm:$0xf]
      %334 = vrot.lane.b32.xlu0 %v326, 114
      %v335 = vpop.permute.xlu0 %334
      %336 = vrot.lane.b32.xlu0 %v327, 114
      %v337 = vpop.permute.xlu0 %336
      %338 = vrot.lane.b32.xlu0 %v328, 114
      %v339 = vpop.permute.xlu0 %338
      %340 = vrot.lane.b32.xlu0 %v329, 114
      %v341 = vpop.permute.xlu0 %340
      %v342 = vrot.slane %v335, 4
      %v343 = vrot.slane %v337, 4
      %v344 = vrot.slane %v339, 4
      %v345 = vrot.slane %v341, 4
      %v346 = vsel %vm287, %v342, %v343
      %vm347 = vcmask 932864
      %v348 = vsel %vm347, %v335, %v346
      %v349 = vsel %vm287, %v344, %v345
      %v350 = vsel %vm347, %v339, %v349
      %353 = vst [vmem:[#allocation2 + $0x30] sm:$0xff] %v348
      %354 = vst [vmem:[#allocation2 + $0x38] sm:$0xff] %v350
      %v355 = vld [vmem:[%s216] sm:$0xff]
      %v356 = vld [vmem:[%s216 + $0x8] sm:$0xf]
      %v357 = vld [vmem:[%s216 + $0xc] sm:$0xff]
      %v358 = vld [vmem:[%s216 + $0x14] sm:$0xf]
      %363 = vrot.lane.b32.xlu0 %v355, 113
      %v364 = vpop.permute.xlu0 %363
      %365 = vrot.lane.b32.xlu0 %v356, 113
      %v366 = vpop.permute.xlu0 %365
      %367 = vrot.lane.b32.xlu0 %v357, 113
      %v368 = vpop.permute.xlu0 %367
      %369 = vrot.lane.b32.xlu0 %v358, 113
      %v370 = vpop.permute.xlu0 %369
      %v371 = vrot.slane %v364, 4
      %v372 = vrot.slane %v366, 4
      %v373 = vrot.slane %v368, 4
      %v374 = vrot.slane %v370, 4
      %v375 = vsel %vm287, %v371, %v372
      %vm376 = vcmask 924672
      %v377 = vsel %vm376, %v364, %v375
      %v378 = vsel %vm287, %v373, %v374
      %v379 = vsel %vm376, %v368, %v378
      %382 = vst [vmem:[#allocation2 + $0x40] sm:$0xff] %v377
      %383 = vst [vmem:[#allocation2 + $0x48] sm:$0xff] %v379
      %v384 = vld [vmem:[%s216] sm:$0xff]
      %v385 = vld [vmem:[%s216 + $0x8] sm:$0xf]
      %v386 = vld [vmem:[%s216 + $0xc] sm:$0xff]
      %v387 = vld [vmem:[%s216 + $0x14] sm:$0xf]
      %392 = vrot.lane.b32.xlu0 %v384, 112
      %v393 = vpop.permute.xlu0 %392
      %394 = vrot.lane.b32.xlu0 %v385, 112
      %v395 = vpop.permute.xlu0 %394
      %396 = vrot.lane.b32.xlu0 %v386, 112
      %v397 = vpop.permute.xlu0 %396
      %398 = vrot.lane.b32.xlu0 %v387, 112
      %v399 = vpop.permute.xlu0 %398
      %v400 = vrot.slane %v393, 4
      %v401 = vrot.slane %v395, 4
      %v402 = vrot.slane %v397, 4
      %v403 = vrot.slane %v399, 4
      %v404 = vsel %vm287, %v400, %v401
      %vm405 = vcmask 916480
      %v406 = vsel %vm405, %v393, %v404
      %v407 = vsel %vm287, %v402, %v403
      %v408 = vsel %vm405, %v397, %v407
      %411 = vst [vmem:[#allocation2 + $0x50] sm:$0xff] %v406
      %412 = vst [vmem:[#allocation2 + $0x58] sm:$0xff] %v408
      %v413 = vld [vmem:[%s216] sm:$0xff]
      %v414 = vld [vmem:[%s216 + $0x8] sm:$0xf]
      %v415 = vld [vmem:[%s216 + $0xc] sm:$0xff]
      %v416 = vld [vmem:[%s216 + $0x14] sm:$0xf]
      %421 = vrot.lane.b32.xlu0 %v413, 100
      %v422 = vpop.permute.xlu0 %421
      %423 = vrot.lane.b32.xlu0 %v414, 100
      %v424 = vpop.permute.xlu0 %423
      %425 = vrot.lane.b32.xlu0 %v415, 100
      %v426 = vpop.permute.xlu0 %425
      %427 = vrot.lane.b32.xlu0 %v416, 100
      %v428 = vpop.permute.xlu0 %427
      %v429 = vrot.slane %v422, 4
      %v430 = vrot.slane %v424, 4
      %v431 = vrot.slane %v426, 4
      %v432 = vrot.slane %v428, 4
      %v433 = vsel %vm287, %v429, %v430
      %vm434 = vcmask 818176
      %v435 = vsel %vm434, %v422, %v433
      %v436 = vsel %vm287, %v431, %v432
      %v437 = vsel %vm434, %v426, %v436
      %440 = vst [vmem:[#allocation2 + $0x60] sm:$0xff] %v435
      %441 = vst [vmem:[#allocation2 + $0x68] sm:$0xff] %v437
      %v442 = vld [vmem:[%s216] sm:$0xff]
      %v443 = vld [vmem:[%s216 + $0x8] sm:$0xf]
      %v444 = vld [vmem:[%s216 + $0xc] sm:$0xff]
      %v445 = vld [vmem:[%s216 + $0x14] sm:$0xf]
      %450 = vrot.lane.b32.xlu0 %v442, 99
      %v451 = vpop.permute.xlu0 %450
      %452 = vrot.lane.b32.xlu0 %v443, 99
      %v453 = vpop.permute.xlu0 %452
      %454 = vrot.lane.b32.xlu0 %v444, 99
      %v455 = vpop.permute.xlu0 %454
      %456 = vrot.lane.b32.xlu0 %v445, 99
      %v457 = vpop.permute.xlu0 %456
      %v458 = vrot.slane %v451, 4
      %v459 = vrot.slane %v453, 4
      %v460 = vrot.slane %v455, 4
      %v461 = vrot.slane %v457, 4
      %v462 = vsel %vm287, %v458, %v459
      %vm463 = vcmask 809984
      %v464 = vsel %vm463, %v451, %v462
      %v465 = vsel %vm287, %v460, %v461
      %v466 = vsel %vm463, %v455, %v465
      %469 = vst [vmem:[#allocation2 + $0x70] sm:$0xff] %v464
      %470 = vst [vmem:[#allocation2 + $0x78] sm:$0xff] %v466
      %v471 = vld [vmem:[%s216] sm:$0xff]
      %v472 = vld [vmem:[%s216 + $0x8] sm:$0xf]
      %v473 = vld [vmem:[%s216 + $0xc] sm:$0xff]
      %v474 = vld [vmem:[%s216 + $0x14] sm:$0xf]
      %479 = vrot.lane.b32.xlu0 %v471, 98
      %v480 = vpop.permute.xlu0 %479
      %481 = vrot.lane.b32.xlu0 %v472, 98
      %v482 = vpop.permute.xlu0 %481
      %483 = vrot.lane.b32.xlu0 %v473, 98
      %v484 = vpop.permute.xlu0 %483
      %485 = vrot.lane.b32.xlu0 %v474, 98
      %v486 = vpop.permute.xlu0 %485
      %v487 = vrot.slane %v480, 4
      %v488 = vrot.slane %v482, 4
      %v489 = vrot.slane %v484, 4
      %v490 = vrot.slane %v486, 4
      %v491 = vsel %vm287, %v487, %v488
      %vm492 = vcmask 801792
      %v493 = vsel %vm492, %v480, %v491
      %v494 = vsel %vm287, %v489, %v490
      %v495 = vsel %vm492, %v484, %v494
      %498 = vst [vmem:[#allocation2 + $0x80] sm:$0xff] %v493
      %499 = vst [vmem:[#allocation2 + $0x88] sm:$0xff] %v495
      %v500 = vld [vmem:[#allocation2] sm:$0xff]
      %v501 = vld [vmem:[#allocation2 + $0x8] sm:$0xff]
      %v502 = vld [vmem:[#allocation2 + $0x10] sm:$0xff]
      %v503 = vld [vmem:[#allocation2 + $0x18] sm:$0xff]
      %v504 = vld [vmem:[#allocation2 + $0x20] sm:$0xff]
      %v505 = vld [vmem:[#allocation2 + $0x28] sm:$0xff]
      %v506 = vld [vmem:[#allocation2 + $0x30] sm:$0xff]
      %v507 = vld [vmem:[#allocation2 + $0x38] sm:$0xff]
      %v508 = vld [vmem:[#allocation2 + $0x40] sm:$0xff]
      %v509 = vld [vmem:[#allocation2 + $0x48] sm:$0xff]
      %v510 = vld [vmem:[#allocation2 + $0x50] sm:$0xff]
      %v511 = vld [vmem:[#allocation2 + $0x58] sm:$0xff]
      %v512 = vld [vmem:[#allocation2 + $0x60] sm:$0xff]
      %v513 = vld [vmem:[#allocation2 + $0x68] sm:$0xff]
      %v514 = vld [vmem:[#allocation2 + $0x70] sm:$0xff]
      %v515 = vld [vmem:[#allocation2 + $0x78] sm:$0xff]
      %v516 = vld [vmem:[#allocation2 + $0x80] sm:$0xff]
      %v517 = vld [vmem:[#allocation2 + $0x88] sm:$0xff]
      %p518 = scmp.ge.s32.totalorder %s21, 0
      %p519 = scmp.lt.s32.totalorder %s21, 8
      %p520 = pnand %p518, %p519
      %p521 = pneg %p520
      // Predicated region
      $region37: #{conv_transpose3d_same.1} parent=31 // pred_check
        _
      $region38: #{conv_transpose3d_same.1} parent=31 // pred_check_branch
        %523 = sbr.rel (%p520) target = $region40
      $region39: #{conv_transpose3d_same.1} parent=31 // pred_region
        %s524 = smul.u32 %s21, 2
        %s525 = smul.addr %s524, 8
        %s526 = scalar_lea.vmem [#allocation3], %s525
        %v527 = vld [vmem:[%s526] sm:$0xff]
        %v528 = vld [vmem:[%s526 + $0x8] sm:$0xff]
        %v529 = vld [vmem:[%s1] sm:$0xff]
        %v531 = vunpack.c.l.b16 %v529
        %v532 = vunpack.c.h.b16 %v529
        %v533 = vpack.c.b16 %v531, %v531
        %v534 = vpack.c.b16 %v532, %v532
        %v554 = vunpack.c.l.b16 %v500
        %v555 = vunpack.c.h.b16 %v500
        %v556 = vunpack.c.l.b16 %v501
        %v557 = vunpack.c.h.b16 %v501
        %v558 = vunpack.c.l.b16 %v502
        %v559 = vunpack.c.h.b16 %v502
        %v560 = vunpack.c.l.b16 %v503
        %v561 = vunpack.c.h.b16 %v503
        %v562 = vunpack.c.l.b16 %v504
        %v563 = vunpack.c.h.b16 %v504
        %v564 = vunpack.c.l.b16 %v505
        %v565 = vunpack.c.h.b16 %v505
        %v566 = vunpack.c.l.b16 %v506
        %v567 = vunpack.c.h.b16 %v506
        %v568 = vunpack.c.l.b16 %v507
        %v569 = vunpack.c.h.b16 %v507
        %v570 = vunpack.c.l.b16 %v508
        %v571 = vunpack.c.h.b16 %v508
        %v572 = vunpack.c.l.b16 %v509
        %v573 = vunpack.c.h.b16 %v509
        %v574 = vunpack.c.l.b16 %v510
        %v575 = vunpack.c.h.b16 %v510
        %v576 = vunpack.c.l.b16 %v511
        %v577 = vunpack.c.h.b16 %v511
        %v578 = vunpack.c.l.b16 %v512
        %v579 = vunpack.c.h.b16 %v512
        %v580 = vunpack.c.l.b16 %v513
        %v581 = vunpack.c.h.b16 %v513
        %v582 = vunpack.c.l.b16 %v514
        %v583 = vunpack.c.h.b16 %v514
        %v584 = vunpack.c.l.b16 %v515
        %v585 = vunpack.c.h.b16 %v515
        %v586 = vunpack.c.l.b16 %v516
        %v587 = vunpack.c.h.b16 %v516
        %v588 = vunpack.c.l.b16 %v517
        %v589 = vunpack.c.h.b16 %v517
        %v590 = vpack.c.b16 %v556, %v554
        %v591 = vpack.c.b16 %v557, %v555
        %v592 = vpack.c.b16 %v560, %v558
        %v593 = vpack.c.b16 %v561, %v559
        %v594 = vpack.c.b16 %v564, %v562
        %v595 = vpack.c.b16 %v565, %v563
        %v596 = vpack.c.b16 %v568, %v566
        %v597 = vpack.c.b16 %v569, %v567
        %v598 = vpack.c.b16 %v572, %v570
        %v599 = vpack.c.b16 %v573, %v571
        %v600 = vpack.c.b16 %v576, %v574
        %v601 = vpack.c.b16 %v577, %v575
        %v602 = vpack.c.b16 %v580, %v578
        %v603 = vpack.c.b16 %v581, %v579
        %v604 = vpack.c.b16 %v584, %v582
        %v605 = vpack.c.b16 %v585, %v583
        %v606 = vpack.c.b16 %v588, %v586
        %v607 = vpack.c.b16 %v589, %v587
        %vm626 = vcmask 130048
        %v628 = vsel %vm626, %v534, 0
        %630 = vmatprep.subr.bf16.mxu0 %v605
        %631 = vmatpush1.bf16.msra.mxu0 %v604
        %632 = vmatprep.subr.bf16.mxu0 %v603
        %633 = vmatpush1.bf16.msra.mxu0 %v602
        %634 = vmatprep.subr.bf16.mxu0 %v601
        %635 = vmatpush1.bf16.msra.mxu0 %v600
        %636 = vmatprep.subr.bf16.mxu0 %v599
        %637 = vmatpush1.bf16.msra.mxu0 %v598
        %638 = vmatprep.subr.bf16.mxu0 %v597
        %639 = vmatpush1.bf16.msra.mxu0 %v596
        %640 = vmatprep.subr.bf16.mxu0 %v595
        %641 = vmatpush1.bf16.msra.mxu0 %v594
        %642 = vmatprep.subr.bf16.mxu0 %v593
        %643 = vmatpush1.bf16.msra.mxu0 %v592
        %644 = vmatprep.subr.bf16.mxu0 %v591
        %645 = vmatpush1.bf16.msra.mxu0 %v590
        %646 = vmatprep.subr.bf16.mxu0 0
        %647 = vmatpush2.bf16.msra.mxu0 0
        %648 = vmatprep.subr.bf16.mxu0 0
        %649 = vmatpush2.bf16.msra.mxu0 0
        %650 = vmatprep.subr.bf16.mxu0 0
        %651 = vmatpush2.bf16.msra.mxu0 0
        %652 = vmatprep.subr.bf16.mxu0 0
        %653 = vmatpush2.bf16.msra.mxu0 0
        %654 = vmatprep.subr.bf16.mxu0 0
        %655 = vmatpush2.bf16.msra.mxu0 0
        %656 = vmatprep.subr.bf16.mxu0 0
        %657 = vmatpush2.bf16.msra.mxu0 0
        %658 = vmatprep.subr.bf16.mxu0 0
        %659 = vmatpush2.bf16.msra.mxu0 0
        %660 = vmatprep.subr.bf16.mxu0 %v607
        %661 = vmatpush2.bf16.msra.mxu0 %v606
        %662 = vmatprep.mubr.bf16.mxu0 %v628
        %663 = vmatmul.mubr.bf16.gmra.mxu0 %v533
        %v664 = vpop.f32.mrf.mxu0
        %v665 = vadd.f32 0.0, %v664
        %v666 = vpop.f32.mrf.mxu0
        %v667 = vadd.f32 0.0, %v666
        %v668 = vpop.f32.mrf.mxu0
        %v669 = vpop.f32.mrf.mxu0
        %670 = vdwg.mxu0
        %v671 = vadd.f32 %v527, %v665
        %v672 = vadd.f32 %v528, %v667
        %673 = vst [vmem:[%s526] sm:$0xff] %v671
        %674 = vst [vmem:[%s526 + $0x8] sm:$0xff] %v672
      $region40: #{conv_transpose3d_same.1} parent=31 // pred_fallthru
        _
      %s675 = ssub.s32 %s21, 1
      %p676 = scmp.ge.s32.totalorder %s675, 0
      %p677 = scmp.lt.s32.totalorder %s675, 8
      %p678 = pnand %p676, %p677
      %p679 = pneg %p678
      // Predicated region
      $region41: #{conv_transpose3d_same.1} parent=31 // pred_check
        _
      $region42: #{conv_transpose3d_same.1} parent=31 // pred_check_branch
        %681 = sbr.rel (%p678) target = $region44
      $region43: #{conv_transpose3d_same.1} parent=31 // pred_region
        %s682 = smul.u32 %s675, 2
        %s683 = smul.addr %s682, 8
        %s684 = scalar_lea.vmem [#allocation3], %s683
        %v685 = vld [vmem:[%s684] sm:$0xff]
        %v686 = vld [vmem:[%s684 + $0x8] sm:$0xff]
        %s687 = scalar_lea.vmem %s1, 8
        %v688 = vld [vmem:[%s687] sm:$0xff]
        %v690 = vunpack.c.l.b16 %v688
        %v691 = vunpack.c.h.b16 %v688
        %v692 = vpack.c.b16 %v690, %v690
        %v693 = vpack.c.b16 %v691, %v691
        %v713 = vunpack.c.l.b16 %v500
        %v714 = vunpack.c.h.b16 %v500
        %v715 = vunpack.c.l.b16 %v501
        %v716 = vunpack.c.h.b16 %v501
        %v717 = vunpack.c.l.b16 %v502
        %v718 = vunpack.c.h.b16 %v502
        %v719 = vunpack.c.l.b16 %v503
        %v720 = vunpack.c.h.b16 %v503
        %v721 = vunpack.c.l.b16 %v504
        %v722 = vunpack.c.h.b16 %v504
        %v723 = vunpack.c.l.b16 %v505
        %v724 = vunpack.c.h.b16 %v505
        %v725 = vunpack.c.l.b16 %v506
        %v726 = vunpack.c.h.b16 %v506
        %v727 = vunpack.c.l.b16 %v507
        %v728 = vunpack.c.h.b16 %v507
        %v729 = vunpack.c.l.b16 %v508
        %v730 = vunpack.c.h.b16 %v508
        %v731 = vunpack.c.l.b16 %v509
        %v732 = vunpack.c.h.b16 %v509
        %v733 = vunpack.c.l.b16 %v510
        %v734 = vunpack.c.h.b16 %v510
        %v735 = vunpack.c.l.b16 %v511
        %v736 = vunpack.c.h.b16 %v511
        %v737 = vunpack.c.l.b16 %v512
        %v738 = vunpack.c.h.b16 %v512
        %v739 = vunpack.c.l.b16 %v513
        %v740 = vunpack.c.h.b16 %v513
        %v741 = vunpack.c.l.b16 %v514
        %v742 = vunpack.c.h.b16 %v514
        %v743 = vunpack.c.l.b16 %v515
        %v744 = vunpack.c.h.b16 %v515
        %v745 = vunpack.c.l.b16 %v516
        %v746 = vunpack.c.h.b16 %v516
        %v747 = vunpack.c.l.b16 %v517
        %v748 = vunpack.c.h.b16 %v517
        %v749 = vpack.c.b16 %v715, %v713
        %v750 = vpack.c.b16 %v716, %v714
        %v751 = vpack.c.b16 %v719, %v717
        %v752 = vpack.c.b16 %v720, %v718
        %v753 = vpack.c.b16 %v723, %v721
        %v754 = vpack.c.b16 %v724, %v722
        %v755 = vpack.c.b16 %v727, %v725
        %v756 = vpack.c.b16 %v728, %v726
        %v757 = vpack.c.b16 %v731, %v729
        %v758 = vpack.c.b16 %v732, %v730
        %v759 = vpack.c.b16 %v735, %v733
        %v760 = vpack.c.b16 %v736, %v734
        %v761 = vpack.c.b16 %v739, %v737
        %v762 = vpack.c.b16 %v740, %v738
        %v763 = vpack.c.b16 %v743, %v741
        %v764 = vpack.c.b16 %v744, %v742
        %v765 = vpack.c.b16 %v747, %v745
        %v766 = vpack.c.b16 %v748, %v746
        %vm785 = vcmask 130048
        %v787 = vsel %vm785, %v693, 0
        %789 = vmatprep.subr.bf16.mxu0 %v764
        %790 = vmatpush1.bf16.msra.mxu0 %v763
        %791 = vmatprep.subr.bf16.mxu0 %v762
        %792 = vmatpush1.bf16.msra.mxu0 %v761
        %793 = vmatprep.subr.bf16.mxu0 %v760
        %794 = vmatpush1.bf16.msra.mxu0 %v759
        %795 = vmatprep.subr.bf16.mxu0 %v758
        %796 = vmatpush1.bf16.msra.mxu0 %v757
        %797 = vmatprep.subr.bf16.mxu0 %v756
        %798 = vmatpush1.bf16.msra.mxu0 %v755
        %799 = vmatprep.subr.bf16.mxu0 %v754
        %800 = vmatpush1.bf16.msra.mxu0 %v753
        %801 = vmatprep.subr.bf16.mxu0 %v752
        %802 = vmatpush1.bf16.msra.mxu0 %v751
        %803 = vmatprep.subr.bf16.mxu0 %v750
        %804 = vmatpush1.bf16.msra.mxu0 %v749
        %805 = vmatprep.subr.bf16.mxu0 0
        %806 = vmatpush2.bf16.msra.mxu0 0
        %807 = vmatprep.subr.bf16.mxu0 0
        %808 = vmatpush2.bf16.msra.mxu0 0
        %809 = vmatprep.subr.bf16.mxu0 0
        %810 = vmatpush2.bf16.msra.mxu0 0
        %811 = vmatprep.subr.bf16.mxu0 0
        %812 = vmatpush2.bf16.msra.mxu0 0
        %813 = vmatprep.subr.bf16.mxu0 0
        %814 = vmatpush2.bf16.msra.mxu0 0
        %815 = vmatprep.subr.bf16.mxu0 0
        %816 = vmatpush2.bf16.msra.mxu0 0
        %817 = vmatprep.subr.bf16.mxu0 0
        %818 = vmatpush2.bf16.msra.mxu0 0
        %819 = vmatprep.subr.bf16.mxu0 %v766
        %820 = vmatpush2.bf16.msra.mxu0 %v765
        %821 = vmatprep.mubr.bf16.mxu0 %v787
        %822 = vmatmul.mubr.bf16.gmra.mxu0 %v692
        %v823 = vpop.f32.mrf.mxu0
        %v824 = vadd.f32 0.0, %v823
        %v825 = vpop.f32.mrf.mxu0
        %v826 = vadd.f32 0.0, %v825
        %v827 = vpop.f32.mrf.mxu0
        %v828 = vpop.f32.mrf.mxu0
        %829 = vdwg.mxu0
        %v830 = vadd.f32 %v685, %v824
        %v831 = vadd.f32 %v686, %v826
        %832 = vst [vmem:[%s684] sm:$0xff] %v830
        %833 = vst [vmem:[%s684 + $0x8] sm:$0xff] %v831
      $region44: #{conv_transpose3d_same.1} parent=31 // pred_fallthru
        _
      %s834 = ssub.s32 %s21, 2
      %p835 = scmp.ge.s32.totalorder %s834, 0
      %p836 = scmp.lt.s32.totalorder %s834, 8
      %p837 = pnand %p835, %p836
      %p838 = pneg %p837
      // Predicated region
      $region45: #{conv_transpose3d_same.1} parent=31 // pred_check
        _
      $region46: #{conv_transpose3d_same.1} parent=31 // pred_check_branch
        %840 = sbr.rel (%p837) target = $region48
      $region47: #{conv_transpose3d_same.1} parent=31 // pred_region
        %s841 = smul.u32 %s834, 2
        %s842 = smul.addr %s841, 8
        %s843 = scalar_lea.vmem [#allocation3], %s842
        %v844 = vld [vmem:[%s843] sm:$0xff]
        %v845 = vld [vmem:[%s843 + $0x8] sm:$0xff]
        %s846 = scalar_lea.vmem %s1, 16
        %v847 = vld [vmem:[%s846] sm:$0xff]
        %v849 = vunpack.c.l.b16 %v847
        %v850 = vunpack.c.h.b16 %v847
        %v851 = vpack.c.b16 %v849, %v849
        %v852 = vpack.c.b16 %v850, %v850
        %v872 = vunpack.c.l.b16 %v500
        %v873 = vunpack.c.h.b16 %v500
        %v874 = vunpack.c.l.b16 %v501
        %v875 = vunpack.c.h.b16 %v501
        %v876 = vunpack.c.l.b16 %v502
        %v877 = vunpack.c.h.b16 %v502
        %v878 = vunpack.c.l.b16 %v503
        %v879 = vunpack.c.h.b16 %v503
        %v880 = vunpack.c.l.b16 %v504
        %v881 = vunpack.c.h.b16 %v504
        %v882 = vunpack.c.l.b16 %v505
        %v883 = vunpack.c.h.b16 %v505
        %v884 = vunpack.c.l.b16 %v506
        %v885 = vunpack.c.h.b16 %v506
        %v886 = vunpack.c.l.b16 %v507
        %v887 = vunpack.c.h.b16 %v507
        %v888 = vunpack.c.l.b16 %v508
        %v889 = vunpack.c.h.b16 %v508
        %v890 = vunpack.c.l.b16 %v509
        %v891 = vunpack.c.h.b16 %v509
        %v892 = vunpack.c.l.b16 %v510
        %v893 = vunpack.c.h.b16 %v510
        %v894 = vunpack.c.l.b16 %v511
        %v895 = vunpack.c.h.b16 %v511
        %v896 = vunpack.c.l.b16 %v512
        %v897 = vunpack.c.h.b16 %v512
        %v898 = vunpack.c.l.b16 %v513
        %v899 = vunpack.c.h.b16 %v513
        %v900 = vunpack.c.l.b16 %v514
        %v901 = vunpack.c.h.b16 %v514
        %v902 = vunpack.c.l.b16 %v515
        %v903 = vunpack.c.h.b16 %v515
        %v904 = vunpack.c.l.b16 %v516
        %v905 = vunpack.c.h.b16 %v516
        %v906 = vunpack.c.l.b16 %v517
        %v907 = vunpack.c.h.b16 %v517
        %v908 = vpack.c.b16 %v874, %v872
        %v909 = vpack.c.b16 %v875, %v873
        %v910 = vpack.c.b16 %v878, %v876
        %v911 = vpack.c.b16 %v879, %v877
        %v912 = vpack.c.b16 %v882, %v880
        %v913 = vpack.c.b16 %v883, %v881
        %v914 = vpack.c.b16 %v886, %v884
        %v915 = vpack.c.b16 %v887, %v885
        %v916 = vpack.c.b16 %v890, %v888
        %v917 = vpack.c.b16 %v891, %v889
        %v918 = vpack.c.b16 %v894, %v892
        %v919 = vpack.c.b16 %v895, %v893
        %v920 = vpack.c.b16 %v898, %v896
        %v921 = vpack.c.b16 %v899, %v897
        %v922 = vpack.c.b16 %v902, %v900
        %v923 = vpack.c.b16 %v903, %v901
        %v924 = vpack.c.b16 %v906, %v904
        %v925 = vpack.c.b16 %v907, %v905
        %vm944 = vcmask 130048
        %v946 = vsel %vm944, %v852, 0
        %948 = vmatprep.subr.bf16.mxu0 %v923
        %949 = vmatpush1.bf16.msra.mxu0 %v922
        %950 = vmatprep.subr.bf16.mxu0 %v921
        %951 = vmatpush1.bf16.msra.mxu0 %v920
        %952 = vmatprep.subr.bf16.mxu0 %v919
        %953 = vmatpush1.bf16.msra.mxu0 %v918
        %954 = vmatprep.subr.bf16.mxu0 %v917
        %955 = vmatpush1.bf16.msra.mxu0 %v916
        %956 = vmatprep.subr.bf16.mxu0 %v915
        %957 = vmatpush1.bf16.msra.mxu0 %v914
        %958 = vmatprep.subr.bf16.mxu0 %v913
        %959 = vmatpush1.bf16.msra.mxu0 %v912
        %960 = vmatprep.subr.bf16.mxu0 %v911
        %961 = vmatpush1.bf16.msra.mxu0 %v910
        %962 = vmatprep.subr.bf16.mxu0 %v909
        %963 = vmatpush1.bf16.msra.mxu0 %v908
        %964 = vmatprep.subr.bf16.mxu0 0
        %965 = vmatpush2.bf16.msra.mxu0 0
        %966 = vmatprep.subr.bf16.mxu0 0
        %967 = vmatpush2.bf16.msra.mxu0 0
        %968 = vmatprep.subr.bf16.mxu0 0
        %969 = vmatpush2.bf16.msra.mxu0 0
        %970 = vmatprep.subr.bf16.mxu0 0
        %971 = vmatpush2.bf16.msra.mxu0 0
        %972 = vmatprep.subr.bf16.mxu0 0
        %973 = vmatpush2.bf16.msra.mxu0 0
        %974 = vmatprep.subr.bf16.mxu0 0
        %975 = vmatpush2.bf16.msra.mxu0 0
        %976 = vmatprep.subr.bf16.mxu0 0
        %977 = vmatpush2.bf16.msra.mxu0 0
        %978 = vmatprep.subr.bf16.mxu0 %v925
        %979 = vmatpush2.bf16.msra.mxu0 %v924
        %980 = vmatprep.mubr.bf16.mxu0 %v946
        %981 = vmatmul.mubr.bf16.gmra.mxu0 %v851
        %v982 = vpop.f32.mrf.mxu0
        %v983 = vadd.f32 0.0, %v982
        %v984 = vpop.f32.mrf.mxu0
        %v985 = vadd.f32 0.0, %v984
        %v986 = vpop.f32.mrf.mxu0
        %v987 = vpop.f32.mrf.mxu0
        %988 = vdwg.mxu0
        %v989 = vadd.f32 %v844, %v983
        %v990 = vadd.f32 %v845, %v985
        %991 = vst [vmem:[%s843] sm:$0xff] %v989
        %992 = vst [vmem:[%s843 + $0x8] sm:$0xff] %v990
      $region48: #{conv_transpose3d_same.1} parent=31 // pred_fallthru
        _
      %p993 = scmp.eq.s32.totalorder %s21, 9
      // Predicated region
      $region49: #{conv_transpose3d_same.1} parent=31 // pred_check
        %p994 = pneg %p993
      $region50: #{conv_transpose3d_same.1} parent=31 // pred_check_branch
        %996 = sbr.rel (%p994) target = $region52
      $region51: #{conv_transpose3d_same.1} parent=31 // pred_region
        %v997 = vld [vmem:[#allocation3] sm:$0xff]
        %v998 = vld [vmem:[#allocation3 + $0x8] sm:$0xff]
        %999 = vst [vmem:[%s227] sm:$0xff] %v997
        %1000 = vst [vmem:[%s227 + $0x8] sm:$0xff] %v998
        %s1001 = scalar_lea.vmem [#allocation3], 16
        %v1002 = vld [vmem:[%s1001] sm:$0xff]
        %v1003 = vld [vmem:[%s1001 + $0x8] sm:$0xff]
        %1004 = vst [vmem:[%s227 + $0x10] sm:$0xff] %v1002
        %1005 = vst [vmem:[%s227 + $0x18] sm:$0xff] %v1003
        %s1006 = scalar_lea.vmem [#allocation3], 32
        %v1007 = vld [vmem:[%s1006] sm:$0xff]
        %v1008 = vld [vmem:[%s1006 + $0x8] sm:$0xff]
        %1009 = vst [vmem:[%s227 + $0x20] sm:$0xff] %v1007
        %1010 = vst [vmem:[%s227 + $0x28] sm:$0xff] %v1008
        %s1011 = scalar_lea.vmem [#allocation3], 48
        %v1012 = vld [vmem:[%s1011] sm:$0xff]
        %v1013 = vld [vmem:[%s1011 + $0x8] sm:$0xff]
        %1014 = vst [vmem:[%s227 + $0x30] sm:$0xff] %v1012
        %1015 = vst [vmem:[%s227 + $0x38] sm:$0xff] %v1013
        %s1016 = scalar_lea.vmem [#allocation3], 64
        %v1017 = vld [vmem:[%s1016] sm:$0xff]
        %v1018 = vld [vmem:[%s1016 + $0x8] sm:$0xff]
        %1019 = vst [vmem:[%s227 + $0x40] sm:$0xff] %v1017
        %1020 = vst [vmem:[%s227 + $0x48] sm:$0xff] %v1018
        %s1021 = scalar_lea.vmem [#allocation3], 80
        %v1022 = vld [vmem:[%s1021] sm:$0xff]
        %v1023 = vld [vmem:[%s1021 + $0x8] sm:$0xff]
        %1024 = vst [vmem:[%s227 + $0x50] sm:$0xff] %v1022
        %1025 = vst [vmem:[%s227 + $0x58] sm:$0xff] %v1023
        %s1026 = scalar_lea.vmem [#allocation3], 96
        %v1027 = vld [vmem:[%s1026] sm:$0xff]
        %v1028 = vld [vmem:[%s1026 + $0x8] sm:$0xff]
        %1029 = vst [vmem:[%s227 + $0x60] sm:$0xff] %v1027
        %1030 = vst [vmem:[%s227 + $0x68] sm:$0xff] %v1028
        %s1031 = scalar_lea.vmem [#allocation3], 112
        %v1032 = vld [vmem:[%s1031] sm:$0xff]
        %v1033 = vld [vmem:[%s1031 + $0x8] sm:$0xff]
        %1034 = vst [vmem:[%s227 + $0x70] sm:$0xff] %v1032
        %1035 = vst [vmem:[%s227 + $0x78] sm:$0xff] %v1033
      $region52: #{conv_transpose3d_same.1} parent=31 // pred_fallthru
        _
      %s1036 = smul.u32 16, %s20
      %p1037 = scmp.lt.s32.totalorder %s19, 1
      %s1038 = scalar_select %p1037, %s19, 1
      %p1039 = scmp.lt.s32.totalorder %s1036, 31
      %s1040 = scalar_select %p1039, %s1036, 31
      %s1041 = smul.addr %s1038, 32
      %s1042 = sadd.s32 %s1040, %s1041
      %s1043 = smul.addr %s1042, 8
      %s1044 = scalar_lea.vmem %s3, %s1043
      // Predicated region
      $region53: #{conv_transpose3d_same.1} parent=31 // pred_check
        %p1045 = pneg %p127
      $region54: #{conv_transpose3d_same.1} parent=31 // pred_check_branch
        %1047 = sbr.rel (%p1045) target = $region56
      $region55: #{conv_transpose3d_same.1} parent=31 // pred_region
        %s1048 = smul.u32 16, %s20
      $region56: #{conv_transpose3d_same.1} parent=31 // pred_fallthru
        _
    $region32: #{conv_transpose3d_same.1} parent=5 // pred_fallthru
      _
    %p1049 = scmp.le.s32.totalorder 2, %s9
    // Predicated region
    $region57: #{conv_transpose3d_same.1} parent=5 // pred_check
      %p1050 = pneg %p1049
    $region58: #{conv_transpose3d_same.1} parent=5 // pred_check_branch
      %1052 = sbr.rel (%p1050) target = $region60
    $region59: #{conv_transpose3d_same.1} parent=5 // pred_region
      %s1053 = ssub.s32 %s9, 2
      // Predicated region
      $region61: #{conv_transpose3d_same.1} parent=59 // pred_check
        %p1054 = pneg %p133
      $region62: #{conv_transpose3d_same.1} parent=59 // pred_check_branch
        %1056 = sbr.rel (%p1054) target = $region64
      $region63: #{conv_transpose3d_same.1} parent=59 // pred_region
        %s1057 = smul.u32 16, %s23
        %p1058 = scmp.lt.s32.totalorder %s22, 1
        %s1059 = scalar_select %p1058, %s22, 1
        %p1060 = scmp.lt.s32.totalorder %s1057, 31
        %s1061 = scalar_select %p1060, %s1057, 31
        %s1062 = smul.addr %s1059, 32
        %s1063 = sadd.s32 %s1061, %s1062
        %s1064 = smul.addr %s1063, 8
        %s1065 = scalar_lea.vmem %s3, %s1064
      $region64: #{conv_transpose3d_same.1} parent=59 // pred_fallthru
        _
    $region60: #{conv_transpose3d_same.1} parent=5 // pred_fallthru
      _
  $region6: #{conv_transpose3d_same.1} parent=0 // loop_footer
    %s13 = sadd.s32 1, %s9
  $region7: #{conv_transpose3d_same.1} parent=0 // loop_footer_branch
    %8 = sbr.rel target = $region3
  $region8: #{conv_transpose3d_same.1} parent=0 // loop_exit
    _

</llo_original>
